<compile_context>
chip_gen: v7x
topology: tpu7x:2x2x1
jax: 0.10.0
libtpu: 0.0.40
codegen_flags: <defaults>
</compile_context>

<pallas_src>
import functools
import numpy as np
import jax
import jax.numpy as jnp
from jax.experimental import pallas as pl
from jax.experimental.pallas import tpu as pltpu


# -----------------------------------------------------------------------------
# Network configuration (small, deterministic, consistent with the module)
# -----------------------------------------------------------------------------
FEATURE_VECTOR_SIZE = 4
D_IN = 3
D_OUT = 1
HIDDEN = [64, 64, 64, 64]
SKIP_IN = (2,)          # layer 2 receives concat([x, input]) / sqrt(2)
GEOMETRIC_INIT = True
BIAS = 1.0
INSIDE_OUTSIDE = False
MULTIRES = 0            # TODO(synk): multires > 0 positional embedder not implemented.

DIMS = [D_IN] + HIDDEN + [D_OUT + FEATURE_VECTOR_SIZE]
NUM_LAYERS = len(DIMS)
PACK_SLOT = max(DIMS[1:-1])     # 64-lane slot per packed sub-tile
HEAD_W = DIMS[-1]               # 5 = sdf + feature vector


def _round_up(a, m):
    return ((a + m - 1) // m) * m


def _cdiv(a, b):
    return (a + b - 1) // b


def _default_pack():
    """2-way lane packing exactly fills the 128-wide MXU (v2-v5); 4-way fills 256 (v6e/v7x)."""
    try:
        kind = jax.devices()[0].device_kind.lower()
    except Exception:
        return 2
    for tag in ("v2", "v3", "v4", "v5"):
        if tag in kind:
            return 2
    return 4


# -----------------------------------------------------------------------------
# Parameter init (mirrors ImplicitNetwork.__init__ with geometric init)
# -----------------------------------------------------------------------------
def init_params(key):
    """Returns list of (W, b) with W of shape (in_dim, out_dim) == pytorch_weight.T.
    weight_norm at init reproduces the same effective weight, so it is a no-op here."""
    params = []
    for l in range(NUM_LAYERS - 1):
        in_dim = DIMS[l]
        if l + 1 in SKIP_IN:
            out_dim = DIMS[l + 1] - DIMS[0]
        else:
            out_dim = DIMS[l + 1]

        key, kw = jax.random.split(key)
        if GEOMETRIC_INIT:
            if l == NUM_LAYERS - 2:
                if not INSIDE_OUTSIDE:
                    mean = np.sqrt(np.pi) / np.sqrt(DIMS[l])
                    w = mean + 1e-4 * jax.random.normal(kw, (out_dim, in_dim), jnp.float32)
                    b = jnp.full((out_dim,), -BIAS, jnp.float32)
                else:
                    mean = -np.sqrt(np.pi) / np.sqrt(DIMS[l])
                    w = mean + 1e-4 * jax.random.normal(kw, (out_dim, in_dim), jnp.float32)
                    b = jnp.full((out_dim,), BIAS, jnp.float32)
            else:
                std = np.sqrt(2.0) / np.sqrt(out_dim)
                w = std * jax.random.normal(kw, (out_dim, in_dim), jnp.float32)
                b = jnp.zeros((out_dim,), jnp.float32)
        else:
            bound = 1.0 / np.sqrt(in_dim)
            w = jax.random.uniform(kw, (out_dim, in_dim), jnp.float32, -bound, bound)
            b = jnp.zeros((out_dim,), jnp.float32)

        params.append((w.T, b.reshape(1, out_dim)))
    return params


# -----------------------------------------------------------------------------
# Softplus(beta=100, threshold=20) — PyTorch semantics, mul instead of div
# -----------------------------------------------------------------------------
def _softplus_beta100(x):
    bx = 100.0 * x
    return jnp.where(bx > 20.0, x, jnp.log1p(jnp.exp(jnp.minimum(bx, 20.0))) * 0.01)


# -----------------------------------------------------------------------------
# Host-side weight packing: 3 VMEM-resident slabs
#   fma_w : (num_fma_sources*pack*D_IN, WL) f32  -- layer-0 rows + skip x_in rows (lane-slotted)
#   mxu_w : (WL, (nL-2)*WL + 128)          bf16  -- block-diagonal hidden weights + packed head
#   bias  : (1,  (nL-1)*WL + 128)          f32   -- lane-slotted biases + packed head bias
# -----------------------------------------------------------------------------
def _prepare_kernel_args(params, pack):
    hidden = PACK_SLOT
    WL = hidden * pack
    inv_sqrt2 = np.float32(1.0 / np.sqrt(2.0))
    nL = NUM_LAYERS - 1

    Ws = [np.asarray(w, np.float32) for (w, _) in params]
    Bs = [np.asarray(b, np.float32).reshape(-1) for (_, b) in params]

    for l in SKIP_IN:
        assert 0 < l < nL - 1, "skip connection must target a hidden layer"

    # Layer-0 weight + each skip layer's x_in rows (pre-scaled by 1/sqrt(2)) go to the
    # VPU-FMA slab; the hidden rows of skip layers (also pre-scaled) go to the MXU slab.
    fma_sources = [Ws[0]]
    mxu_hidden = []
    for l in range(1, nL - 1):
        w = Ws[l]
        if l in SKIP_IN:
            na = w.shape[0] - D_IN
            mxu_hidden.append(w[:na] * inv_sqrt2)
            fma_sources.append(w[na:] * inv_sqrt2)
        else:
            mxu_hidden.append(w)
    w_head, b_head = Ws[-1], Bs[-1]

    def block_diag(w):
        in_d, out_d = w.shape
        assert in_d <= hidden and out_d <= hidden
        m = np.zeros((WL, WL), np.float32)
        for s in range(pack):
            m[s * hidden:s * hidden + in_d, s * hidden:s * hidden + out_d] = w
        return m

    # Head folded into the packing, padded to a lane-dense 128-wide output.
    wh_packed = np.zeros((WL, 128), np.float32)
    for s in range(pack):
        wh_packed[s * hidden:s * hidden + w_head.shape[0],
                  s * HEAD_W:(s + 1) * HEAD_W] = w_head
    mxu = np.concatenate([block_diag(w) for w in mxu_hidden] + [wh_packed], axis=1)

    def lane_tile(b, slot, width):
        v = np.zeros((width,), np.float32)
        for s in range(pack):
            v[s * slot:s * slot + b.shape[0]] = b
        return v

    bias = np.concatenate(
        [lane_tile(b, hidden, WL) for b in Bs[:-1]] + [lane_tile(b_head, HEAD_W, 128)]
    ).reshape(1, -1)

    fma = np.zeros((len(fma_sources) * pack * D_IN, WL), np.float32)
    for which, w in enumerate(fma_sources):
        for s in range(pack):
            for j in range(D_IN):
                fma[(which * pack + s) * D_IN + j,
                    s * hidden:s * hidden + w.shape[1]] = w[j]

    return (jnp.asarray(fma, jnp.float32),
            jnp.asarray(mxu, jnp.bfloat16),
            jnp.asarray(bias, jnp.float32))


# -----------------------------------------------------------------------------
# Pallas kernel
# -----------------------------------------------------------------------------
def _mlp_kernel(x_ref, fma_w_ref, mxu_w_ref, bias_ref, out_ref, *,
                pack, hidden, d_in, num_layers, skip_in):
    f32, bf16 = jnp.float32, jnp.bfloat16
    rows = x_ref.shape[1]          # rows per lane-packed sub-tile
    WL = hidden * pack
    nL = num_layers - 1            # number of linear layers

    fma_w = fma_w_ref[...]         # tiny, load once

    def fma_row(which, s, j):
        r = (which * pack + s) * d_in + j
        return fma_w[r:r + 1, :]                       # (1, WL)

    def bias(l):
        return bias_ref[:, l * WL:(l + 1) * WL]        # (1, WL), 128-aligned lane slice

    # ---- Layer 0 (K = d_in): VPU broadcast-FMA into the packed lane layout.
    # The skip layers' x_in contributions accumulate in the same pass so each input
    # column's lane-broadcast is computed once and reused (hoisted per review).
    y0 = bias(0)
    skip_add = {l: bias(l) for l in skip_in}
    for s in range(pack):
        xs = x_ref[s].astype(f32)                      # (rows, d_in)
        for j in range(d_in):
            xb = jnp.broadcast_to(xs[:, j:j + 1], (rows, WL))
            y0 = y0 + xb * fma_row(0, s, j)
            for t, l in enumerate(skip_in):
                skip_add[l] = skip_add[l] + xb * fma_row(1 + t, s, j)
    x = _softplus_beta100(y0)

    # ---- Hidden layers: block-diagonal bf16 MXU matmuls with f32 accumulation.
    for l in range(1, nL - 1):
        w = mxu_w_ref[:, (l - 1) * WL:l * WL]
        add = skip_add[l] if l in skip_in else bias(l)
        x = _softplus_beta100(
            jnp.dot(x.astype(bf16), w, preferred_element_type=f32) + add)

    # ---- Head (folded into the packing): lane-dense 128-wide output, sub-tile s's
    # HEAD_W channels live at lanes [s*HEAD_W, (s+1)*HEAD_W).
    w_head = mxu_w_ref[:, (nL - 2) * WL:(nL - 2) * WL + 128]
    b_head = bias_ref[:, (nL - 1) * WL:(nL - 1) * WL + 128]
    out = jnp.dot(x.astype(bf16), w_head, preferred_element_type=f32) + b_head
    out_ref[...] = out.astype(out_ref.dtype)


def _cost_estimate(n_rows, params):
    flops = 0
    transcendentals = 0
    bytes_accessed = n_rows * (D_IN + DIMS[-1]) * 4
    for l, (w, b) in enumerate(params):
        in_dim, out_dim = w.shape
        flops += 2 * n_rows * in_dim * out_dim
        if l < NUM_LAYERS - 2:
            transcendentals += 2 * n_rows * out_dim     # exp + log1p per hidden element
        bytes_accessed += (int(w.size) + int(b.size)) * 4
    return pl.CostEstimate(flops=int(flops), transcendentals=int(transcendentals),
                           bytes_accessed=int(bytes_accessed))


def implicit_network_forward(x, params, *, tile_rows=8192, pack=None):
    """Forward pass of ImplicitNetwork on points x of shape (N, d_in). Handles ragged N."""
    N, d_in = x.shape
    assert d_in == D_IN
    if pack is None:
        pack = _default_pack()
    hidden = PACK_SLOT
    WL = hidden * pack
    assert WL % 128 == 0 and pack * HEAD_W <= 128

    # --- Tiling: `tile` rows per grid step, split into `pack` lane sub-tiles of `rows`
    # rows (multiple of 8). Keep an even number of grid steps whenever there is enough
    # work so v7x's two TensorCores both get tiles (dimension_semantics="parallel").
    row_align = 8 * pack
    n_min = _round_up(max(N, 1), row_align)
    tile_cap = max(row_align, (min(int(tile_rows), n_min) // row_align) * row_align)
    steps = _cdiv(n_min, tile_cap)
    if steps % 2 == 1 and n_min >= 2 * row_align:
        steps += 1
    tile = _round_up(_cdiv(n_min, steps), row_align)
    n_pad = steps * tile
    rows = tile // pack

    x_pad = x if n_pad == N else jnp.pad(x, ((0, n_pad - N), (0, 0)))
    x_blocks = x_pad.reshape(steps * pack, rows, d_in)

    fma_w, mxu_w, bias = _prepare_kernel_args(params, pack)

    kernel = functools.partial(_mlp_kernel, pack=pack, hidden=hidden, d_in=D_IN,
                               num_layers=NUM_LAYERS, skip_in=tuple(sorted(SKIP_IN)))

    out = pl.pallas_call(
        kernel,
        out_shape=jax.ShapeDtypeStruct((steps * rows, 128), jnp.float32),
        grid_spec=pltpu.PrefetchScalarGridSpec(
            num_scalar_prefetch=0,
            grid=(steps,),
            in_specs=[
                pl.BlockSpec((pack, rows, d_in), lambda i: (i, 0, 0)),
                pl.BlockSpec(fma_w.shape, lambda i: (0, 0)),
                pl.BlockSpec(mxu_w.shape, lambda i: (0, 0)),
                pl.BlockSpec(bias.shape, lambda i: (0, 0)),
            ],
            out_specs=pl.BlockSpec((rows, 128), lambda i: (i, 0)),
        ),
        compiler_params=pltpu.CompilerParams(
            dimension_semantics=("parallel",),
            vmem_limit_bytes=32 * 1024 * 1024,
        ),
        cost_estimate=_cost_estimate(n_pad, params),
    )(x_blocks, fma_w, mxu_w, bias)

    # Un-pack the lane-packed, lane-dense output.
    out = out.reshape(steps, rows, 128)
    subs = [out[:, :, s * HEAD_W:(s + 1) * HEAD_W] for s in range(pack)]
    result = jnp.stack(subs, axis=1).reshape(n_pad, HEAD_W)
    return result[:N]


# -----------------------------------------------------------------------------
# References (mirror the PyTorch forward) for correctness checks
# -----------------------------------------------------------------------------
def reference_forward_f32(x, params):
    x_in = x.astype(jnp.float32)
    h = x_in
    for l in range(NUM_LAYERS - 1):
        w, b = params[l]
        if l in SKIP_IN:
            h = jnp.concatenate([h, x_in], axis=1) / np.sqrt(2.0)
        h = h @ w + b
        if l < NUM_LAYERS - 2:
            h = _softplus_beta100(h)
    return h


def reference_forward_mixed(x, params):
    """Same arithmetic as the kernel: f32 for the K=3 contributions, bf16 MXU inputs
    with f32 accumulation for the 64-wide matmuls."""
    f32, bf16 = jnp.float32, jnp.bfloat16
    inv = np.float32(1.0 / np.sqrt(2.0))
    x_in = x.astype(f32)

    def mm(h, w):
        return jnp.dot(h.astype(bf16), jnp.asarray(w, f32).astype(bf16),
                       preferred_element_type=f32)

    (w0, b0), (w1, b1), (w2, b2), (w3, b3), (wh, bh) = params
    h = _softplus_beta100(x_in @ w0 + b0)
    h = _softplus_beta100(mm(h, w1) + b1)
    na = w2.shape[0] - D_IN
    h = _softplus_beta100(mm(h, w2[:na] * inv) + x_in @ (w2[na:] * inv) + b2)
    h = _softplus_beta100(mm(h, w3) + b3)
    return mm(h, wh) + bh


if __name__ == "__main__":
    key = jax.random.PRNGKey(0)
    key, kx, kp = jax.random.split(key, 3)
    params = init_params(kp)

    # Small, deliberately ragged point count: exercises padding + multi-tile paths.
    N = 200
    x = jax.random.normal(kx, (N, D_IN), jnp.float32)

    ref_f32 = np.asarray(reference_forward_f32(x, params))
    ref_mix = np.asarray(reference_forward_mixed(x, params))

    # Both packings (2-way = v5e MXU width, 4-way = v6e/v7x MXU width) are correct on
    # any chip; the default is auto-selected from the device kind.
    for pack in (2, 4):
        out = np.asarray(jax.block_until_ready(
            implicit_network_forward(x, params, pack=pack)))
        assert out.shape == (N, D_OUT + FEATURE_VECTOR_SIZE)
        assert np.allclose(out, ref_mix, rtol=5e-3, atol=5e-4), (
            f"pack={pack} mixed-precision-ref max err {np.max(np.abs(out - ref_mix))}")
        assert np.allclose(out, ref_f32, rtol=5e-2, atol=5e-2), (
            f"pack={pack} f32-ref max err {np.max(np.abs(out - ref_f32))}")

    # Auto pack + small explicit tile: multi-step grid with padded last tile.
    out_small = np.asarray(jax.block_until_ready(
        implicit_network_forward(x, params, tile_rows=64)))
    assert np.allclose(out_small, ref_mix, rtol=5e-3, atol=5e-4), (
        f"small-tile max err {np.max(np.abs(out_small - ref_mix))}")

    # TODO(synk): gradient()/get_outputs()/get_sdf_vals() rely on torch.autograd and the
    # bounding-sphere clamp; only the forward pass is implemented here.
    print("KERNEL_OK")
</pallas_src>

<mosaic_0001>
module attributes {stable_mosaic.version = 11 : i64} {
  func.func @_mlp_kernel(%arg0: i32, %arg1: memref<2x56x3xf32, #tpu.memory_space<vmem>>, %arg2: memref<12x128xf32, #tpu.memory_space<vmem>>, %arg3: memref<128x512xbf16, #tpu.memory_space<vmem>>, %arg4: memref<1x640xf32, #tpu.memory_space<vmem>>, %arg5: memref<56x128xf32, #tpu.memory_space<vmem>>) attributes {dimension_semantics = [#tpu.dimension_semantics<parallel>], iteration_bounds = array<i64: 2>, scalar_prefetch = 0 : i64, scratch_operands = 0 : i64, tpu.core_type = #tpu.core_type<tc>, window_params = [{transform_indices = @transform_0, window_bounds = array<i64: 2, 56, 3>}, {pipeline_mode = #tpu.pipeline_mode<synchronous>, transform_indices = @transform_1, window_bounds = array<i64: 12, 128>}, {pipeline_mode = #tpu.pipeline_mode<synchronous>, transform_indices = @transform_2, window_bounds = array<i64: 128, 512>}, {pipeline_mode = #tpu.pipeline_mode<synchronous>, transform_indices = @transform_3, window_bounds = array<i64: 1, 640>}, {transform_indices = @transform_4, window_bounds = array<i64: 56, 128>}]} {
    %c0 = arith.constant 0 : index
    %c0_0 = arith.constant 0 : index
    %0 = vector.load %arg2[%c0, %c0_0] : memref<12x128xf32, #tpu.memory_space<vmem>>, vector<12x128xf32>
    %c0_1 = arith.constant 0 : index
    %c0_2 = arith.constant 0 : index
    %1 = vector.load %arg4[%c0_1, %c0_2] : memref<1x640xf32, #tpu.memory_space<vmem>>, vector<1x128xf32>
    %c0_3 = arith.constant 0 : index
    %c256 = arith.constant 256 : index
    %2 = vector.load %arg4[%c0_3, %c256] : memref<1x640xf32, #tpu.memory_space<vmem>>, vector<1x128xf32>
    %c0_4 = arith.constant 0 : index
    %c0_5 = arith.constant 0 : index
    %c0_6 = arith.constant 0 : index
    %3 = vector.load %arg1[%c0_4, %c0_5, %c0_6] : memref<2x56x3xf32, #tpu.memory_space<vmem>>, vector<1x56x3xf32>
    %4 = vector.shape_cast %3 : vector<1x56x3xf32> to vector<56x3xf32>
    %5 = vector.extract_strided_slice %4 {offsets = [0, 0], sizes = [56, 1], strides = [1, 1]} : vector<56x3xf32> to vector<56x1xf32>
    %6 = vector.shape_cast %5 : vector<56x1xf32> to vector<56x1xf32>
    %7 = vector.broadcast %6 : vector<56x1xf32> to vector<56x128xf32>
    %8 = vector.extract_strided_slice %0 {offsets = [0, 0], sizes = [1, 128], strides = [1, 1]} : vector<12x128xf32> to vector<1x128xf32>
    %9 = vector.broadcast %8 : vector<1x128xf32> to vector<56x128xf32>
    %10 = arith.mulf %7, %9 : vector<56x128xf32>
    %11 = vector.broadcast %1 : vector<1x128xf32> to vector<56x128xf32>
    %12 = arith.addf %11, %10 : vector<56x128xf32>
    %13 = vector.extract_strided_slice %0 {offsets = [6, 0], sizes = [1, 128], strides = [1, 1]} : vector<12x128xf32> to vector<1x128xf32>
    %14 = vector.broadcast %13 : vector<1x128xf32> to vector<56x128xf32>
    %15 = arith.mulf %7, %14 : vector<56x128xf32>
    %16 = vector.broadcast %2 : vector<1x128xf32> to vector<56x128xf32>
    %17 = arith.addf %16, %15 : vector<56x128xf32>
    %18 = vector.extract_strided_slice %4 {offsets = [0, 1], sizes = [56, 1], strides = [1, 1]} : vector<56x3xf32> to vector<56x1xf32>
    %19 = vector.shape_cast %18 : vector<56x1xf32> to vector<56x1xf32>
    %20 = vector.broadcast %19 : vector<56x1xf32> to vector<56x128xf32>
    %21 = vector.extract_strided_slice %0 {offsets = [1, 0], sizes = [1, 128], strides = [1, 1]} : vector<12x128xf32> to vector<1x128xf32>
    %22 = vector.broadcast %21 : vector<1x128xf32> to vector<56x128xf32>
    %23 = arith.mulf %20, %22 : vector<56x128xf32>
    %24 = arith.addf %12, %23 : vector<56x128xf32>
    %25 = vector.extract_strided_slice %0 {offsets = [7, 0], sizes = [1, 128], strides = [1, 1]} : vector<12x128xf32> to vector<1x128xf32>
    %26 = vector.broadcast %25 : vector<1x128xf32> to vector<56x128xf32>
    %27 = arith.mulf %20, %26 : vector<56x128xf32>
    %28 = arith.addf %17, %27 : vector<56x128xf32>
    %29 = vector.extract_strided_slice %4 {offsets = [0, 2], sizes = [56, 1], strides = [1, 1]} : vector<56x3xf32> to vector<56x1xf32>
    %30 = vector.shape_cast %29 : vector<56x1xf32> to vector<56x1xf32>
    %31 = vector.broadcast %30 : vector<56x1xf32> to vector<56x128xf32>
    %32 = vector.extract_strided_slice %0 {offsets = [2, 0], sizes = [1, 128], strides = [1, 1]} : vector<12x128xf32> to vector<1x128xf32>
    %33 = vector.broadcast %32 : vector<1x128xf32> to vector<56x128xf32>
    %34 = arith.mulf %31, %33 : vector<56x128xf32>
    %35 = arith.addf %24, %34 : vector<56x128xf32>
    %36 = vector.extract_strided_slice %0 {offsets = [8, 0], sizes = [1, 128], strides = [1, 1]} : vector<12x128xf32> to vector<1x128xf32>
    %37 = vector.broadcast %36 : vector<1x128xf32> to vector<56x128xf32>
    %38 = arith.mulf %31, %37 : vector<56x128xf32>
    %39 = arith.addf %28, %38 : vector<56x128xf32>
    %c1 = arith.constant 1 : index
    %c0_7 = arith.constant 0 : index
    %c0_8 = arith.constant 0 : index
    %40 = vector.load %arg1[%c1, %c0_7, %c0_8] : memref<2x56x3xf32, #tpu.memory_space<vmem>>, vector<1x56x3xf32>
    %41 = vector.shape_cast %40 : vector<1x56x3xf32> to vector<56x3xf32>
    %42 = vector.extract_strided_slice %41 {offsets = [0, 0], sizes = [56, 1], strides = [1, 1]} : vector<56x3xf32> to vector<56x1xf32>
    %43 = vector.shape_cast %42 : vector<56x1xf32> to vector<56x1xf32>
    %44 = vector.broadcast %43 : vector<56x1xf32> to vector<56x128xf32>
    %45 = vector.extract_strided_slice %0 {offsets = [3, 0], sizes = [1, 128], strides = [1, 1]} : vector<12x128xf32> to vector<1x128xf32>
    %46 = vector.broadcast %45 : vector<1x128xf32> to vector<56x128xf32>
    %47 = arith.mulf %44, %46 : vector<56x128xf32>
    %48 = arith.addf %35, %47 : vector<56x128xf32>
    %49 = vector.extract_strided_slice %0 {offsets = [9, 0], sizes = [1, 128], strides = [1, 1]} : vector<12x128xf32> to vector<1x128xf32>
    %50 = vector.broadcast %49 : vector<1x128xf32> to vector<56x128xf32>
    %51 = arith.mulf %44, %50 : vector<56x128xf32>
    %52 = arith.addf %39, %51 : vector<56x128xf32>
    %53 = vector.extract_strided_slice %41 {offsets = [0, 1], sizes = [56, 1], strides = [1, 1]} : vector<56x3xf32> to vector<56x1xf32>
    %54 = vector.shape_cast %53 : vector<56x1xf32> to vector<56x1xf32>
    %55 = vector.broadcast %54 : vector<56x1xf32> to vector<56x128xf32>
    %56 = vector.extract_strided_slice %0 {offsets = [4, 0], sizes = [1, 128], strides = [1, 1]} : vector<12x128xf32> to vector<1x128xf32>
    %57 = vector.broadcast %56 : vector<1x128xf32> to vector<56x128xf32>
    %58 = arith.mulf %55, %57 : vector<56x128xf32>
    %59 = arith.addf %48, %58 : vector<56x128xf32>
    %60 = vector.extract_strided_slice %0 {offsets = [10, 0], sizes = [1, 128], strides = [1, 1]} : vector<12x128xf32> to vector<1x128xf32>
    %61 = vector.broadcast %60 : vector<1x128xf32> to vector<56x128xf32>
    %62 = arith.mulf %55, %61 : vector<56x128xf32>
    %63 = arith.addf %52, %62 : vector<56x128xf32>
    %64 = vector.extract_strided_slice %41 {offsets = [0, 2], sizes = [56, 1], strides = [1, 1]} : vector<56x3xf32> to vector<56x1xf32>
    %65 = vector.shape_cast %64 : vector<56x1xf32> to vector<56x1xf32>
    %66 = vector.broadcast %65 : vector<56x1xf32> to vector<56x128xf32>
    %67 = vector.extract_strided_slice %0 {offsets = [5, 0], sizes = [1, 128], strides = [1, 1]} : vector<12x128xf32> to vector<1x128xf32>
    %68 = vector.broadcast %67 : vector<1x128xf32> to vector<56x128xf32>
    %69 = arith.mulf %66, %68 : vector<56x128xf32>
    %70 = arith.addf %59, %69 : vector<56x128xf32>
    %71 = vector.extract_strided_slice %0 {offsets = [11, 0], sizes = [1, 128], strides = [1, 1]} : vector<12x128xf32> to vector<1x128xf32>
    %72 = vector.broadcast %71 : vector<1x128xf32> to vector<56x128xf32>
    %73 = arith.mulf %66, %72 : vector<56x128xf32>
    %74 = arith.addf %63, %73 : vector<56x128xf32>
    %cst = arith.constant 1.000000e+02 : f32
    %75 = vector.broadcast %cst : f32 to vector<56x128xf32>
    %76 = arith.mulf %75, %70 : vector<56x128xf32>
    %cst_9 = arith.constant 2.000000e+01 : f32
    %77 = vector.broadcast %cst_9 : f32 to vector<56x128xf32>
    %78 = arith.cmpf ogt, %76, %77 : vector<56x128xf32>
    %cst_10 = arith.constant 2.000000e+01 : f32
    %79 = vector.broadcast %cst_10 : f32 to vector<56x128xf32>
    %80 = arith.minimumf %76, %79 : vector<56x128xf32>
    %81 = math.exp %80 : vector<56x128xf32>
    %82 = math.log1p %81 : vector<56x128xf32>
    %cst_11 = arith.constant 0.00999999977 : f32
    %83 = vector.broadcast %cst_11 : f32 to vector<56x128xf32>
    %84 = arith.mulf %82, %83 : vector<56x128xf32>
    %85 = arith.select %78, %70, %84 : vector<56x128xi1>, vector<56x128xf32>
    %c0_12 = arith.constant 0 : index
    %c0_13 = arith.constant 0 : index
    %86 = vector.load %arg3[%c0_12, %c0_13] : memref<128x512xbf16, #tpu.memory_space<vmem>>, vector<128x128xbf16>
    %c0_14 = arith.constant 0 : index
    %c128 = arith.constant 128 : index
    %87 = vector.load %arg4[%c0_14, %c128] : memref<1x640xf32, #tpu.memory_space<vmem>>, vector<1x128xf32>
    %88 = arith.truncf %85 : vector<56x128xf32> to vector<56x128xbf16>
    %cst_15 = arith.constant dense<0.000000e+00> : vector<56x128xf32>
    %89 = tpu.matmul %88, %86, %cst_15 {dimension_numbers = #tpu.dot_dimension_numbers<[1], [0], [0], [1], [0, 0, 1, 1], [], []>} : vector<56x128xbf16>, vector<128x128xbf16>, vector<56x128xf32> -> vector<56x128xf32>
    %90 = vector.broadcast %87 : vector<1x128xf32> to vector<56x128xf32>
    %91 = arith.addf %89, %90 : vector<56x128xf32>
    %cst_16 = arith.constant 1.000000e+02 : f32
    %92 = vector.broadcast %cst_16 : f32 to vector<56x128xf32>
    %93 = arith.mulf %92, %91 : vector<56x128xf32>
    %cst_17 = arith.constant 2.000000e+01 : f32
    %94 = vector.broadcast %cst_17 : f32 to vector<56x128xf32>
    %95 = arith.cmpf ogt, %93, %94 : vector<56x128xf32>
    %cst_18 = arith.constant 2.000000e+01 : f32
    %96 = vector.broadcast %cst_18 : f32 to vector<56x128xf32>
    %97 = arith.minimumf %93, %96 : vector<56x128xf32>
    %98 = math.exp %97 : vector<56x128xf32>
    %99 = math.log1p %98 : vector<56x128xf32>
    %cst_19 = arith.constant 0.00999999977 : f32
    %100 = vector.broadcast %cst_19 : f32 to vector<56x128xf32>
    %101 = arith.mulf %99, %100 : vector<56x128xf32>
    %102 = arith.select %95, %91, %101 : vector<56x128xi1>, vector<56x128xf32>
    %c0_20 = arith.constant 0 : index
    %c128_21 = arith.constant 128 : index
    %103 = vector.load %arg3[%c0_20, %c128_21] : memref<128x512xbf16, #tpu.memory_space<vmem>>, vector<128x128xbf16>
    %104 = arith.truncf %102 : vector<56x128xf32> to vector<56x128xbf16>
    %cst_22 = arith.constant dense<0.000000e+00> : vector<56x128xf32>
    %105 = tpu.matmul %104, %103, %cst_22 {dimension_numbers = #tpu.dot_dimension_numbers<[1], [0], [0], [1], [0, 0, 1, 1], [], []>} : vector<56x128xbf16>, vector<128x128xbf16>, vector<56x128xf32> -> vector<56x128xf32>
    %106 = arith.addf %105, %74 : vector<56x128xf32>
    %cst_23 = arith.constant 1.000000e+02 : f32
    %107 = vector.broadcast %cst_23 : f32 to vector<56x128xf32>
    %108 = arith.mulf %107, %106 : vector<56x128xf32>
    %cst_24 = arith.constant 2.000000e+01 : f32
    %109 = vector.broadcast %cst_24 : f32 to vector<56x128xf32>
    %110 = arith.cmpf ogt, %108, %109 : vector<56x128xf32>
    %cst_25 = arith.constant 2.000000e+01 : f32
    %111 = vector.broadcast %cst_25 : f32 to vector<56x128xf32>
    %112 = arith.minimumf %108, %111 : vector<56x128xf32>
    %113 = math.exp %112 : vector<56x128xf32>
    %114 = math.log1p %113 : vector<56x128xf32>
    %cst_26 = arith.constant 0.00999999977 : f32
    %115 = vector.broadcast %cst_26 : f32 to vector<56x128xf32>
    %116 = arith.mulf %114, %115 : vector<56x128xf32>
    %117 = arith.select %110, %106, %116 : vector<56x128xi1>, vector<56x128xf32>
    %c0_27 = arith.constant 0 : index
    %c256_28 = arith.constant 256 : index
    %118 = vector.load %arg3[%c0_27, %c256_28] : memref<128x512xbf16, #tpu.memory_space<vmem>>, vector<128x128xbf16>
    %c0_29 = arith.constant 0 : index
    %c384 = arith.constant 384 : index
    %119 = vector.load %arg4[%c0_29, %c384] : memref<1x640xf32, #tpu.memory_space<vmem>>, vector<1x128xf32>
    %120 = arith.truncf %117 : vector<56x128xf32> to vector<56x128xbf16>
    %cst_30 = arith.constant dense<0.000000e+00> : vector<56x128xf32>
    %121 = tpu.matmul %120, %118, %cst_30 {dimension_numbers = #tpu.dot_dimension_numbers<[1], [0], [0], [1], [0, 0, 1, 1], [], []>} : vector<56x128xbf16>, vector<128x128xbf16>, vector<56x128xf32> -> vector<56x128xf32>
    %122 = vector.broadcast %119 : vector<1x128xf32> to vector<56x128xf32>
    %123 = arith.addf %121, %122 : vector<56x128xf32>
    %cst_31 = arith.constant 1.000000e+02 : f32
    %124 = vector.broadcast %cst_31 : f32 to vector<56x128xf32>
    %125 = arith.mulf %124, %123 : vector<56x128xf32>
    %cst_32 = arith.constant 2.000000e+01 : f32
    %126 = vector.broadcast %cst_32 : f32 to vector<56x128xf32>
    %127 = arith.cmpf ogt, %125, %126 : vector<56x128xf32>
    %cst_33 = arith.constant 2.000000e+01 : f32
    %128 = vector.broadcast %cst_33 : f32 to vector<56x128xf32>
    %129 = arith.minimumf %125, %128 : vector<56x128xf32>
    %130 = math.exp %129 : vector<56x128xf32>
    %131 = math.log1p %130 : vector<56x128xf32>
    %cst_34 = arith.constant 0.00999999977 : f32
    %132 = vector.broadcast %cst_34 : f32 to vector<56x128xf32>
    %133 = arith.mulf %131, %132 : vector<56x128xf32>
    %134 = arith.select %127, %123, %133 : vector<56x128xi1>, vector<56x128xf32>
    %c0_35 = arith.constant 0 : index
    %c384_36 = arith.constant 384 : index
    %135 = vector.load %arg3[%c0_35, %c384_36] : memref<128x512xbf16, #tpu.memory_space<vmem>>, vector<128x128xbf16>
    %c0_37 = arith.constant 0 : index
    %c512 = arith.constant 512 : index
    %136 = vector.load %arg4[%c0_37, %c512] : memref<1x640xf32, #tpu.memory_space<vmem>>, vector<1x128xf32>
    %137 = arith.truncf %134 : vector<56x128xf32> to vector<56x128xbf16>
    %cst_38 = arith.constant dense<0.000000e+00> : vector<56x128xf32>
    %138 = tpu.matmul %137, %135, %cst_38 {dimension_numbers = #tpu.dot_dimension_numbers<[1], [0], [0], [1], [0, 0, 1, 1], [], []>} : vector<56x128xbf16>, vector<128x128xbf16>, vector<56x128xf32> -> vector<56x128xf32>
    %139 = vector.broadcast %136 : vector<1x128xf32> to vector<56x128xf32>
    %140 = arith.addf %138, %139 : vector<56x128xf32>
    %c0_39 = arith.constant 0 : index
    %c0_40 = arith.constant 0 : index
    %141 = vector.load %arg5[%c0_39, %c0_40] : memref<56x128xf32, #tpu.memory_space<vmem>>, vector<56x128xf32>
    tpu.vector_store %arg5[%c0_39, %c0_40], %140 {strides = array<i32>} : memref<56x128xf32, #tpu.memory_space<vmem>>, vector<56x128xf32>,
    return
  }
  func.func @transform_0(%arg0: i32) -> (i32, i32, i32) {
    %c0_i32 = arith.constant 0 : i32
    %c0_i32_0 = arith.constant 0 : i32
    %c0_i32_1 = arith.constant 0 : i32
    return %arg0, %c0_i32, %c0_i32_0 : i32, i32, i32
  }
  func.func @transform_1(%arg0: i32) -> (i32, i32) {
    %c0_i32 = arith.constant 0 : i32
    %c0_i32_0 = arith.constant 0 : i32
    %c0_i32_1 = arith.constant 0 : i32
    return %c0_i32, %c0_i32_0 : i32, i32
  }
  func.func @transform_2(%arg0: i32) -> (i32, i32) {
    %c0_i32 = arith.constant 0 : i32
    %c0_i32_0 = arith.constant 0 : i32
    %c0_i32_1 = arith.constant 0 : i32
    return %c0_i32, %c0_i32_0 : i32, i32
  }
  func.func @transform_3(%arg0: i32) -> (i32, i32) {
    %c0_i32 = arith.constant 0 : i32
    %c0_i32_0 = arith.constant 0 : i32
    %c0_i32_1 = arith.constant 0 : i32
    return %c0_i32, %c0_i32_0 : i32, i32
  }
  func.func @transform_4(%arg0: i32) -> (i32, i32) {
    %c0_i32 = arith.constant 0 : i32
    %c0_i32_0 = arith.constant 0 : i32
    return %arg0, %c0_i32 : i32, i32
  }
}

</mosaic_0001>

<llo_original>
// kernel: tpu_custom_call.1
$region0: #{tpu_custom_call.1}
  #allocation0 [shape = 'u32[]', space=smem, size = 0x4, offset = 0x4, fixed_abs, tag = 'smem constant byte address 0x4 - core index']
  #allocation1 [shape = 'u32[144,128]{1,0:T(1,128)}', space=vmem, size = 0x12000, scoped, tag = 'internal scratch']
  %s0 = inlined_call_operand.vmem [shape: f32[4,56,3], index: 0, kind: input, shape index: {}]
  %s1 = inlined_call_operand.vmem [shape: f32[12,128], index: 1, kind: input, shape index: {}]
  %s2 = inlined_call_operand.hbm [shape: bf16[128,512], index: 2, kind: input, shape index: {}]
  %s3 = inlined_call_operand.vmem [shape: f32[1,640], index: 3, kind: input, shape index: {}]
  %s4 = inlined_call_operand.hbm [shape: f32[112,128], index: 4, kind: output, shape index: {}]
  %s5 = sld [smem:[#allocation0]]
  $region53: #{tpu_custom_call.1} parent=0
    _
  %s7 = ssub.s32 1, %s5
  %s8 = scalar_select 0, %s7, %s5
  $region1: #{tpu_custom_call.1} parent=0
    #allocation2 [shape = 'u8[131072]{0}', space=vmem, size = 0x20000, scoped, tag = 'input window, operand 2, single buffered']
    #allocation3 [shape = 's32[2]{0}', space=sflag, size = 0x8, scoped, tag = 'scoped memory for tpu_custom_call.1']
    #allocation4 [shape = 's32[2]{0}', space=sflag, size = 0x8, scoped, tag = 'scoped memory for tpu_custom_call.1']
    #allocation5 [shape = 'u8[57344]{0}', space=vmem, size = 0xe000, scoped, tag = 'output window, operand 0']
    %9 = vsyncpa [#allocation3], 0
    %10 = vsyncpa [#allocation4], 0
    %s11 = scalar_lea.sflag [#allocation4], 1
    %12 = vsyncpa %s11, 0
    loop: start=0, step=1, limit=4
    $region2: #{tpu_custom_call.1} parent=1 // loop_pre_header
      _
    $region3: #{tpu_custom_call.1} parent=1 // loop_header
      %s14 = sphi 0, %s18
      %p15 = scmp.ge.s32.totalorder %s14, 4
      %s24 = sphi 0, %s26
      %s27 = sphi 0, %s24
      %s28 = sphi 0, %s27
      %s44 = sphi 0, %s28
      %s48 = sphi 0, %s48
      %s50 = sphi 0, %s48
      %s51 = sphi 0, %s50
      %s65 = sphi 0, %s51
      %s69 = sphi 0, %s69
      %s71 = sphi 0, %s69
      %s72 = sphi 0, %s71
      %s86 = sphi 0, %s72
      %s90 = sphi 0, %s90
      %s92 = sphi 0, %s90
      %s93 = sphi 0, %s92
      %s107 = sphi 0, %s93
      %s113 = sphi 0, %s115
      %s116 = sphi 0, %s113
      %s117 = sphi 0, %s116
      %s133 = sphi 0, %s117
    $region4: #{tpu_custom_call.1} parent=1 // loop_header_branch
      %17 = sbr.rel (%p15) target = $region8
    $region5: #{tpu_custom_call.1} parent=1 // loop_body
      %s19 = ssub.s32 %s14, 1
      %s20 = ssub.s32 %s14, 2
      %s21 = sadd.s32 %s14, 1
      %s22 = ssub.s32 %s14, %s21
      %p23 = scmp.eq.s32.totalorder %s22, 0
      %s25 = sadd.s32 %s24, 1
      %s26 = scalar_select %p23, %s24, %s25
      %p29 = pneg %p23
      %p30 = scmp.eq.s32.totalorder %s14, 1
      %p31 = por %p29, %p30
      %p32 = scmp.ne.s32.totalorder %s24, %s27
      %p33 = scmp.eq.s32.totalorder %s14, 0
      %p34 = por %p32, %p33
      %p35 = scmp.ne.s32.totalorder %s24, %s27
      %p36 = scmp.eq.s32.totalorder %s19, 1
      %p37 = por %p35, %p36
      %p38 = scmp.ne.s32.totalorder %s27, %s28
      %p39 = scmp.eq.s32.totalorder %s19, 0
      %p40 = por %p38, %p39
      %p41 = scmp.ne.s32.totalorder %s27, %s28
      %p42 = scmp.eq.s32.totalorder %s20, 1
      %p43 = por %p41, %p42
      %p45 = scmp.ne.s32.totalorder %s28, %s44
      %p46 = scmp.eq.s32.totalorder %s20, 0
      %p47 = por %p45, %p46
      %s49 = sadd.s32 %s48, 1
      %p52 = scmp.eq.s32.totalorder %s14, 1
      %p53 = scmp.ne.s32.totalorder %s48, %s50
      %p54 = scmp.eq.s32.totalorder %s14, 0
      %p55 = por %p53, %p54
      %p56 = scmp.ne.s32.totalorder %s48, %s50
      %p57 = scmp.eq.s32.totalorder %s19, 1
      %p58 = por %p56, %p57
      %p59 = scmp.ne.s32.totalorder %s50, %s51
      %p60 = scmp.eq.s32.totalorder %s19, 0
      %p61 = por %p59, %p60
      %p62 = scmp.ne.s32.totalorder %s50, %s51
      %p63 = scmp.eq.s32.totalorder %s20, 1
      %p64 = por %p62, %p63
      %p66 = scmp.ne.s32.totalorder %s51, %s65
      %p67 = scmp.eq.s32.totalorder %s20, 0
      %p68 = por %p66, %p67
      %s70 = sadd.s32 %s69, 1
      %p73 = scmp.eq.s32.totalorder %s14, 1
      %p74 = scmp.ne.s32.totalorder %s69, %s71
      %p75 = scmp.eq.s32.totalorder %s14, 0
      %p76 = por %p74, %p75
      %p77 = scmp.ne.s32.totalorder %s69, %s71
      %p78 = scmp.eq.s32.totalorder %s19, 1
      %p79 = por %p77, %p78
      %p80 = scmp.ne.s32.totalorder %s71, %s72
      %p81 = scmp.eq.s32.totalorder %s19, 0
      %p82 = por %p80, %p81
      %p83 = scmp.ne.s32.totalorder %s71, %s72
      %p84 = scmp.eq.s32.totalorder %s20, 1
      %p85 = por %p83, %p84
      %p87 = scmp.ne.s32.totalorder %s72, %s86
      %p88 = scmp.eq.s32.totalorder %s20, 0
      %p89 = por %p87, %p88
      %s91 = sadd.s32 %s90, 1
      %p94 = scmp.eq.s32.totalorder %s14, 1
      %p95 = scmp.ne.s32.totalorder %s90, %s92
      %p96 = scmp.eq.s32.totalorder %s14, 0
      %p97 = por %p95, %p96
      %p98 = scmp.ne.s32.totalorder %s90, %s92
      %p99 = scmp.eq.s32.totalorder %s19, 1
      %p100 = por %p98, %p99
      %p101 = scmp.ne.s32.totalorder %s92, %s93
      %p102 = scmp.eq.s32.totalorder %s19, 0
      %p103 = por %p101, %p102
      %p104 = scmp.ne.s32.totalorder %s92, %s93
      %p105 = scmp.eq.s32.totalorder %s20, 1
      %p106 = por %p104, %p105
      %p108 = scmp.ne.s32.totalorder %s93, %s107
      %p109 = scmp.eq.s32.totalorder %s20, 0
      %p110 = por %p108, %p109
      %s111 = ssub.s32 %s14, %s21
      %p112 = scmp.eq.s32.totalorder %s111, 0
      %s114 = sadd.s32 %s113, 1
      %s115 = scalar_select %p112, %s113, %s114
      %p118 = pneg %p112
      %p119 = scmp.eq.s32.totalorder %s14, 1
      %p120 = por %p118, %p119
      %p121 = scmp.ne.s32.totalorder %s113, %s116
      %p122 = scmp.eq.s32.totalorder %s14, 0
      %p123 = por %p121, %p122
      %p124 = scmp.ne.s32.totalorder %s113, %s116
      %p125 = scmp.eq.s32.totalorder %s19, 1
      %p126 = por %p124, %p125
      %p127 = scmp.ne.s32.totalorder %s116, %s117
      %p128 = scmp.eq.s32.totalorder %s19, 0
      %p129 = por %p127, %p128
      %p130 = scmp.ne.s32.totalorder %s116, %s117
      %p131 = scmp.eq.s32.totalorder %s20, 1
      %p132 = por %p130, %p131
      %p134 = scmp.ne.s32.totalorder %s117, %s133
      %p135 = scmp.eq.s32.totalorder %s20, 0
      %p136 = por %p134, %p135
      %p137 = scmp.le.s32.totalorder 1, %s14
      %p138 = scmp.lt.s32.totalorder %s14, 3
      %p139 = pnand %p137, %p138
      %p140 = pneg %p139
      // Predicated region
      $region9: #{tpu_custom_call.1} parent=5 // pred_check
        _
      $region10: #{tpu_custom_call.1} parent=5 // pred_check_branch
        %142 = sbr.rel (%p139) target = $region12
      $region11: #{tpu_custom_call.1} parent=5 // pred_region
        %s143 = ssub.s32 %s14, 1
        // Predicated region
        $region13: #{tpu_custom_call.1} parent=11 // pred_check
          %p144 = pneg %p61
        $region14: #{tpu_custom_call.1} parent=11 // pred_check_branch
          %146 = sbr.rel (%p144) target = $region16
        $region15: #{tpu_custom_call.1} parent=11 // pred_region
          _
        $region16: #{tpu_custom_call.1} parent=11 // pred_fallthru
          _
        // Predicated region
        $region17: #{tpu_custom_call.1} parent=11 // pred_check
          %p147 = pneg %p82
        $region18: #{tpu_custom_call.1} parent=11 // pred_check_branch
          %149 = sbr.rel (%p147) target = $region20
        $region19: #{tpu_custom_call.1} parent=11 // pred_region
          %s151 = ssub.s32 4096, 4096
          %152 = vsyncadd [#allocation3], %s151
          %s153 = sshll.u32 [#allocation2], 4
          %s154 = int_to_ptr.vmem [resolvable:$true] %s153
          %159 = dma.hbm_to_vmem [thread:$0]  %s2, 4096, %s154, [#allocation3], 256, 256, 16
        $region20: #{tpu_custom_call.1} parent=11 // pred_fallthru
          _
        // Predicated region
        $region21: #{tpu_custom_call.1} parent=11 // pred_check
          %p160 = pneg %p103
        $region22: #{tpu_custom_call.1} parent=11 // pred_check_branch
          %162 = sbr.rel (%p160) target = $region24
        $region23: #{tpu_custom_call.1} parent=11 // pred_region
          _
        $region24: #{tpu_custom_call.1} parent=11 // pred_fallthru
          _
      $region12: #{tpu_custom_call.1} parent=5 // pred_fallthru
        _
      %p163 = scmp.lt.s32.totalorder %s14, 2
      // Predicated region
      $region25: #{tpu_custom_call.1} parent=5 // pred_check
        %p164 = pneg %p163
      $region26: #{tpu_custom_call.1} parent=5 // pred_check_branch
        %166 = sbr.rel (%p164) target = $region28
      $region27: #{tpu_custom_call.1} parent=5 // pred_region
        // Predicated region
        $region29: #{tpu_custom_call.1} parent=27 // pred_check
          %p167 = pneg %p34
        $region30: #{tpu_custom_call.1} parent=27 // pred_check_branch
          %169 = sbr.rel (%p167) target = $region32
        $region31: #{tpu_custom_call.1} parent=27 // pred_region
          %s170 = smul.u32 2, %s14
          %p171 = scmp.lt.s32.totalorder %s170, 3
          %s172 = scalar_select %p171, %s170, 3
          %s173 = smul.addr %s172, 7
          %s174 = smul.addr %s173, 8
          %s175 = scalar_lea.vmem %s0, %s174
          %s176 = smul.u32 2, %s14
        $region32: #{tpu_custom_call.1} parent=27 // pred_fallthru
          _
      $region28: #{tpu_custom_call.1} parent=5 // pred_fallthru
        _
      %p177 = scmp.le.s32.totalorder 1, %s14
      %p178 = scmp.lt.s32.totalorder %s14, 3
      %p179 = pnand %p177, %p178
      %p180 = pneg %p179
      // Predicated region
      $region33: #{tpu_custom_call.1} parent=5 // pred_check
        _
      $region34: #{tpu_custom_call.1} parent=5 // pred_check_branch
        %182 = sbr.rel (%p179) target = $region36
      $region35: #{tpu_custom_call.1} parent=5 // pred_region
        %s183 = ssub.s32 %s14, 1
        // Predicated region
        $region37: #{tpu_custom_call.1} parent=35 // pred_check
          %p184 = pneg %p82
        $region38: #{tpu_custom_call.1} parent=35 // pred_check_branch
          %186 = sbr.rel (%p184) target = $region40
        $region39: #{tpu_custom_call.1} parent=35 // pred_region
          %187 = dma.done [#allocation3], 4096
        $region40: #{tpu_custom_call.1} parent=35 // pred_fallthru
          _
        %s188 = smul.u32 2, %s19
        %p189 = scmp.lt.s32.totalorder %s188, 3
        %s190 = scalar_select %p189, %s188, 3
        %s191 = smul.addr %s190, 7
        %s192 = smul.addr %s191, 8
        %s193 = scalar_lea.vmem %s0, %s192
        %p194 = pneg %p40
        %p195 = pneg %p37
        %p196 = pneg %p61
        %p197 = pneg %p58
        %p198 = pneg %p82
        %p199 = pneg %p79
        %p200 = pneg %p103
        %p201 = pneg %p100
        %p202 = pneg %p129
        %p203 = pneg %p126
        %s204 = sand.u32 %s116, 1
        %s205 = scalar_lea.sflag [#allocation4], %s204
        %s206 = sand.u32 %s116, 1
        %s207 = smul.addr %s206, 56
        %s208 = scalar_lea.vmem [#allocation5], %s207
        %s209 = smul.u32 2, %s19
        %p210 = scmp.lt.s32.totalorder %s209, 3
        %s211 = scalar_select %p210, %s209, 3
        %s212 = smul.addr %s211, 7
        %s213 = smul.addr %s212, 8
        %s214 = scalar_lea.vmem %s0, %s213
        %s215 = smul.u32 2, %s19
        %s216 = smul.u32 7, %s19
        %v218 = vld [vmem:[%s1] sm:$0xff]
        %v219 = vld [vmem:[%s1 + $0x8] sm:$0xf]
        %v220 = vld [vmem:[%s3] sm:$0x1]
        %v221 = vld [vmem:[%s3 + $0x2] sm:$0x1]
        %v222 = vld [vmem:[%s214] sm:$0xff]
        %v223 = vld [vmem:[%s214 + $0x8] sm:$0xff]
        %v224 = vld [vmem:[%s214 + $0x10] sm:$0xff]
        %v225 = vld [vmem:[%s214 + $0x18] sm:$0xff]
        %v226 = vld [vmem:[%s214 + $0x20] sm:$0xff]
        %v227 = vld [vmem:[%s214 + $0x28] sm:$0xff]
        %v228 = vld [vmem:[%s214 + $0x30] sm:$0xff]
        %230 = vset.pattern.permute.xlu0 0
        %231 = vperm.xlu0 %230, %v222
        %v232 = vpop.permute.xlu0 %231
        %235 = vset.pattern.permute.xlu0 0
        %236 = vperm.xlu0 %235, %v223
        %v237 = vpop.permute.xlu0 %236
        %240 = vset.pattern.permute.xlu0 0
        %241 = vperm.xlu0 %240, %v224
        %v242 = vpop.permute.xlu0 %241
        %245 = vset.pattern.permute.xlu0 0
        %246 = vperm.xlu0 %245, %v225
        %v247 = vpop.permute.xlu0 %246
        %250 = vset.pattern.permute.xlu0 0
        %251 = vperm.xlu0 %250, %v226
        %v252 = vpop.permute.xlu0 %251
        %255 = vset.pattern.permute.xlu0 0
        %256 = vperm.xlu0 %255, %v227
        %v257 = vpop.permute.xlu0 %256
        %260 = vset.pattern.permute.xlu0 0
        %261 = vperm.xlu0 %260, %v228
        %v262 = vpop.permute.xlu0 %261
        %v264 = vlaneseq
        %v265 = vshrl.u32 %v264, 7
        %v266 = vsub.s32 0, %v265
        %v267 = vrot.slane %v218, %v266
        %v268 = vmul.f32 %v232, %v267
        %v269 = vmul.f32 %v237, %v267
        %v270 = vmul.f32 %v242, %v267
        %v271 = vmul.f32 %v247, %v267
        %v272 = vmul.f32 %v252, %v267
        %v273 = vmul.f32 %v257, %v267
        %v274 = vmul.f32 %v262, %v267
        %v276 = vlaneseq
        %v277 = vshrl.u32 %v276, 7
        %v278 = vsub.s32 0, %v277
        %v279 = vrot.slane %v220, %v278
        %v281 = vadd.f32 %v279, %v268
        %v282 = vadd.f32 %v279, %v269
        %v283 = vadd.f32 %v279, %v270
        %v284 = vadd.f32 %v279, %v271
        %v285 = vadd.f32 %v279, %v272
        %v286 = vadd.f32 %v279, %v273
        %v287 = vadd.f32 %v279, %v274
        %v288 = vlaneseq
        %v289 = vshrl.u32 %v288, 7
        %v290 = vsub.s32 6, %v289
        %v291 = vrot.slane %v218, %v290
        %v292 = vmul.f32 %v232, %v291
        %v293 = vmul.f32 %v237, %v291
        %v294 = vmul.f32 %v242, %v291
        %v295 = vmul.f32 %v247, %v291
        %v296 = vmul.f32 %v252, %v291
        %v297 = vmul.f32 %v257, %v291
        %v298 = vmul.f32 %v262, %v291
        %v300 = vlaneseq
        %v301 = vshrl.u32 %v300, 7
        %v302 = vsub.s32 0, %v301
        %v303 = vrot.slane %v221, %v302
        %v305 = vadd.f32 %v303, %v292
        %v306 = vadd.f32 %v303, %v293
        %v307 = vadd.f32 %v303, %v294
        %v308 = vadd.f32 %v303, %v295
        %v309 = vadd.f32 %v303, %v296
        %v310 = vadd.f32 %v303, %v297
        %v311 = vadd.f32 %v303, %v298
        %312 = vset.pattern.permute.xlu0 1
        %313 = vperm.xlu0 %312, %v222
        %v314 = vpop.permute.xlu0 %313
        %316 = vset.pattern.permute.xlu0 1
        %317 = vperm.xlu0 %316, %v223
        %v318 = vpop.permute.xlu0 %317
        %320 = vset.pattern.permute.xlu0 1
        %321 = vperm.xlu0 %320, %v224
        %v322 = vpop.permute.xlu0 %321
        %324 = vset.pattern.permute.xlu0 1
        %325 = vperm.xlu0 %324, %v225
        %v326 = vpop.permute.xlu0 %325
        %328 = vset.pattern.permute.xlu0 1
        %329 = vperm.xlu0 %328, %v226
        %v330 = vpop.permute.xlu0 %329
        %332 = vset.pattern.permute.xlu0 1
        %333 = vperm.xlu0 %332, %v227
        %v334 = vpop.permute.xlu0 %333
        %336 = vset.pattern.permute.xlu0 1
        %337 = vperm.xlu0 %336, %v228
        %v338 = vpop.permute.xlu0 %337
        %v340 = vlaneseq
        %v341 = vshrl.u32 %v340, 7
        %v342 = vsub.s32 1, %v341
        %v343 = vrot.slane %v218, %v342
        %v344 = vmul.f32 %v314, %v343
        %v345 = vmul.f32 %v318, %v343
        %v346 = vmul.f32 %v322, %v343
        %v347 = vmul.f32 %v326, %v343
        %v348 = vmul.f32 %v330, %v343
        %v349 = vmul.f32 %v334, %v343
        %v350 = vmul.f32 %v338, %v343
        %v351 = vadd.f32 %v281, %v344
        %v352 = vadd.f32 %v282, %v345
        %v353 = vadd.f32 %v283, %v346
        %v354 = vadd.f32 %v284, %v347
        %v355 = vadd.f32 %v285, %v348
        %v356 = vadd.f32 %v286, %v349
        %v357 = vadd.f32 %v287, %v350
        %v358 = vlaneseq
        %v359 = vshrl.u32 %v358, 7
        %v360 = vsub.s32 7, %v359
        %v361 = vrot.slane %v218, %v360
        %v362 = vmul.f32 %v314, %v361
        %v363 = vmul.f32 %v318, %v361
        %v364 = vmul.f32 %v322, %v361
        %v365 = vmul.f32 %v326, %v361
        %v366 = vmul.f32 %v330, %v361
        %v367 = vmul.f32 %v334, %v361
        %v368 = vmul.f32 %v338, %v361
        %v369 = vadd.f32 %v305, %v362
        %v370 = vadd.f32 %v306, %v363
        %v371 = vadd.f32 %v307, %v364
        %v372 = vadd.f32 %v308, %v365
        %v373 = vadd.f32 %v309, %v366
        %v374 = vadd.f32 %v310, %v367
        %v375 = vadd.f32 %v311, %v368
        %376 = vset.pattern.permute.xlu0 2
        %377 = vperm.xlu0 %376, %v222
        %v378 = vpop.permute.xlu0 %377
        %380 = vset.pattern.permute.xlu0 2
        %381 = vperm.xlu0 %380, %v223
        %v382 = vpop.permute.xlu0 %381
        %384 = vset.pattern.permute.xlu0 2
        %385 = vperm.xlu0 %384, %v224
        %v386 = vpop.permute.xlu0 %385
        %388 = vset.pattern.permute.xlu0 2
        %389 = vperm.xlu0 %388, %v225
        %v390 = vpop.permute.xlu0 %389
        %392 = vset.pattern.permute.xlu0 2
        %393 = vperm.xlu0 %392, %v226
        %v394 = vpop.permute.xlu0 %393
        %396 = vset.pattern.permute.xlu0 2
        %397 = vperm.xlu0 %396, %v227
        %v398 = vpop.permute.xlu0 %397
        %400 = vset.pattern.permute.xlu0 2
        %401 = vperm.xlu0 %400, %v228
        %v402 = vpop.permute.xlu0 %401
        %v404 = vlaneseq
        %v405 = vshrl.u32 %v404, 7
        %v406 = vsub.s32 2, %v405
        %v407 = vrot.slane %v218, %v406
        %v408 = vmul.f32 %v378, %v407
        %v409 = vmul.f32 %v382, %v407
        %v410 = vmul.f32 %v386, %v407
        %v411 = vmul.f32 %v390, %v407
        %v412 = vmul.f32 %v394, %v407
        %v413 = vmul.f32 %v398, %v407
        %v414 = vmul.f32 %v402, %v407
        %v415 = vadd.f32 %v351, %v408
        %v416 = vadd.f32 %v352, %v409
        %v417 = vadd.f32 %v353, %v410
        %v418 = vadd.f32 %v354, %v411
        %v419 = vadd.f32 %v355, %v412
        %v420 = vadd.f32 %v356, %v413
        %v421 = vadd.f32 %v357, %v414
        %v422 = vlaneseq
        %v423 = vshrl.u32 %v422, 7
        %v424 = vsub.s32 0, %v423
        %v425 = vrot.slane %v219, %v424
        %v426 = vmul.f32 %v378, %v425
        %v427 = vmul.f32 %v382, %v425
        %v428 = vmul.f32 %v386, %v425
        %v429 = vmul.f32 %v390, %v425
        %v430 = vmul.f32 %v394, %v425
        %v431 = vmul.f32 %v398, %v425
        %v432 = vmul.f32 %v402, %v425
        %v433 = vadd.f32 %v369, %v426
        %v434 = vadd.f32 %v370, %v427
        %v435 = vadd.f32 %v371, %v428
        %v436 = vadd.f32 %v372, %v429
        %v437 = vadd.f32 %v373, %v430
        %v438 = vadd.f32 %v374, %v431
        %v439 = vadd.f32 %v375, %v432
        %s440 = scalar_lea.vmem %s214, 56
        %v441 = vld [vmem:[%s440] sm:$0xff]
        %v442 = vld [vmem:[%s440 + $0x8] sm:$0xff]
        %v443 = vld [vmem:[%s440 + $0x10] sm:$0xff]
        %v444 = vld [vmem:[%s440 + $0x18] sm:$0xff]
        %v445 = vld [vmem:[%s440 + $0x20] sm:$0xff]
        %v446 = vld [vmem:[%s440 + $0x28] sm:$0xff]
        %v447 = vld [vmem:[%s440 + $0x30] sm:$0xff]
        %449 = vset.pattern.permute.xlu0 0
        %450 = vperm.xlu0 %449, %v441
        %v451 = vpop.permute.xlu0 %450
        %454 = vset.pattern.permute.xlu0 0
        %455 = vperm.xlu0 %454, %v442
        %v456 = vpop.permute.xlu0 %455
        %459 = vset.pattern.permute.xlu0 0
        %460 = vperm.xlu0 %459, %v443
        %v461 = vpop.permute.xlu0 %460
        %464 = vset.pattern.permute.xlu0 0
        %465 = vperm.xlu0 %464, %v444
        %v466 = vpop.permute.xlu0 %465
        %469 = vset.pattern.permute.xlu0 0
        %470 = vperm.xlu0 %469, %v445
        %v471 = vpop.permute.xlu0 %470
        %474 = vset.pattern.permute.xlu0 0
        %475 = vperm.xlu0 %474, %v446
        %v476 = vpop.permute.xlu0 %475
        %479 = vset.pattern.permute.xlu0 0
        %480 = vperm.xlu0 %479, %v447
        %v481 = vpop.permute.xlu0 %480
        %v483 = vlaneseq
        %v484 = vshrl.u32 %v483, 7
        %v485 = vsub.s32 3, %v484
        %v486 = vrot.slane %v218, %v485
        %v487 = vmul.f32 %v451, %v486
        %v488 = vmul.f32 %v456, %v486
        %v489 = vmul.f32 %v461, %v486
        %v490 = vmul.f32 %v466, %v486
        %v491 = vmul.f32 %v471, %v486
        %v492 = vmul.f32 %v476, %v486
        %v493 = vmul.f32 %v481, %v486
        %v494 = vadd.f32 %v415, %v487
        %v495 = vadd.f32 %v416, %v488
        %v496 = vadd.f32 %v417, %v489
        %v497 = vadd.f32 %v418, %v490
        %v498 = vadd.f32 %v419, %v491
        %v499 = vadd.f32 %v420, %v492
        %v500 = vadd.f32 %v421, %v493
        %v501 = vlaneseq
        %v502 = vshrl.u32 %v501, 7
        %v503 = vsub.s32 1, %v502
        %v504 = vrot.slane %v219, %v503
        %v505 = vmul.f32 %v451, %v504
        %v506 = vmul.f32 %v456, %v504
        %v507 = vmul.f32 %v461, %v504
        %v508 = vmul.f32 %v466, %v504
        %v509 = vmul.f32 %v471, %v504
        %v510 = vmul.f32 %v476, %v504
        %v511 = vmul.f32 %v481, %v504
        %v512 = vadd.f32 %v433, %v505
        %v513 = vadd.f32 %v434, %v506
        %v514 = vadd.f32 %v435, %v507
        %v515 = vadd.f32 %v436, %v508
        %v516 = vadd.f32 %v437, %v509
        %v517 = vadd.f32 %v438, %v510
        %v518 = vadd.f32 %v439, %v511
        %519 = vset.pattern.permute.xlu0 1
        %520 = vperm.xlu0 %519, %v441
        %v521 = vpop.permute.xlu0 %520
        %523 = vset.pattern.permute.xlu0 1
        %524 = vperm.xlu0 %523, %v442
        %v525 = vpop.permute.xlu0 %524
        %527 = vset.pattern.permute.xlu0 1
        %528 = vperm.xlu0 %527, %v443
        %v529 = vpop.permute.xlu0 %528
        %531 = vset.pattern.permute.xlu0 1
        %532 = vperm.xlu0 %531, %v444
        %v533 = vpop.permute.xlu0 %532
        %535 = vset.pattern.permute.xlu0 1
        %536 = vperm.xlu0 %535, %v445
        %v537 = vpop.permute.xlu0 %536
        %539 = vset.pattern.permute.xlu0 1
        %540 = vperm.xlu0 %539, %v446
        %v541 = vpop.permute.xlu0 %540
        %543 = vset.pattern.permute.xlu0 1
        %544 = vperm.xlu0 %543, %v447
        %v545 = vpop.permute.xlu0 %544
        %v547 = vlaneseq
        %v548 = vshrl.u32 %v547, 7
        %v549 = vsub.s32 4, %v548
        %v550 = vrot.slane %v218, %v549
        %v551 = vmul.f32 %v521, %v550
        %v552 = vmul.f32 %v525, %v550
        %v553 = vmul.f32 %v529, %v550
        %v554 = vmul.f32 %v533, %v550
        %v555 = vmul.f32 %v537, %v550
        %v556 = vmul.f32 %v541, %v550
        %v557 = vmul.f32 %v545, %v550
        %v558 = vadd.f32 %v494, %v551
        %v559 = vadd.f32 %v495, %v552
        %v560 = vadd.f32 %v496, %v553
        %v561 = vadd.f32 %v497, %v554
        %v562 = vadd.f32 %v498, %v555
        %v563 = vadd.f32 %v499, %v556
        %v564 = vadd.f32 %v500, %v557
        %v565 = vlaneseq
        %v566 = vshrl.u32 %v565, 7
        %v567 = vsub.s32 2, %v566
        %v568 = vrot.slane %v219, %v567
        %v569 = vmul.f32 %v521, %v568
        %v570 = vmul.f32 %v525, %v568
        %v571 = vmul.f32 %v529, %v568
        %v572 = vmul.f32 %v533, %v568
        %v573 = vmul.f32 %v537, %v568
        %v574 = vmul.f32 %v541, %v568
        %v575 = vmul.f32 %v545, %v568
        %v576 = vadd.f32 %v512, %v569
        %v577 = vadd.f32 %v513, %v570
        %v578 = vadd.f32 %v514, %v571
        %v579 = vadd.f32 %v515, %v572
        %v580 = vadd.f32 %v516, %v573
        %v581 = vadd.f32 %v517, %v574
        %v582 = vadd.f32 %v518, %v575
        %583 = vset.pattern.permute.xlu0 2
        %584 = vperm.xlu0 %583, %v441
        %v585 = vpop.permute.xlu0 %584
        %587 = vset.pattern.permute.xlu0 2
        %588 = vperm.xlu0 %587, %v442
        %v589 = vpop.permute.xlu0 %588
        %591 = vset.pattern.permute.xlu0 2
        %592 = vperm.xlu0 %591, %v443
        %v593 = vpop.permute.xlu0 %592
        %595 = vset.pattern.permute.xlu0 2
        %596 = vperm.xlu0 %595, %v444
        %v597 = vpop.permute.xlu0 %596
        %599 = vset.pattern.permute.xlu0 2
        %600 = vperm.xlu0 %599, %v445
        %v601 = vpop.permute.xlu0 %600
        %603 = vset.pattern.permute.xlu0 2
        %604 = vperm.xlu0 %603, %v446
        %v605 = vpop.permute.xlu0 %604
        %607 = vset.pattern.permute.xlu0 2
        %608 = vperm.xlu0 %607, %v447
        %v609 = vpop.permute.xlu0 %608
        %v611 = vlaneseq
        %v612 = vshrl.u32 %v611, 7
        %v613 = vsub.s32 5, %v612
        %v614 = vrot.slane %v218, %v613
        %v615 = vmul.f32 %v585, %v614
        %v616 = vmul.f32 %v589, %v614
        %v617 = vmul.f32 %v593, %v614
        %v618 = vmul.f32 %v597, %v614
        %v619 = vmul.f32 %v601, %v614
        %v620 = vmul.f32 %v605, %v614
        %v621 = vmul.f32 %v609, %v614
        %v622 = vadd.f32 %v558, %v615
        %v623 = vadd.f32 %v559, %v616
        %v624 = vadd.f32 %v560, %v617
        %v625 = vadd.f32 %v561, %v618
        %v626 = vadd.f32 %v562, %v619
        %v627 = vadd.f32 %v563, %v620
        %v628 = vadd.f32 %v564, %v621
        %v629 = vlaneseq
        %v630 = vshrl.u32 %v629, 7
        %v631 = vsub.s32 3, %v630
        %v632 = vrot.slane %v219, %v631
        %v633 = vmul.f32 %v585, %v632
        %v634 = vmul.f32 %v589, %v632
        %v635 = vmul.f32 %v593, %v632
        %v636 = vmul.f32 %v597, %v632
        %v637 = vmul.f32 %v601, %v632
        %v638 = vmul.f32 %v605, %v632
        %v639 = vmul.f32 %v609, %v632
        %v640 = vadd.f32 %v576, %v633
        %v641 = vadd.f32 %v577, %v634
        %v642 = vadd.f32 %v578, %v635
        %v643 = vadd.f32 %v579, %v636
        %v644 = vadd.f32 %v580, %v637
        %v645 = vadd.f32 %v581, %v638
        %v646 = vadd.f32 %v582, %v639
        %v647 = vmul.f32 %v622, 100.0
        %v648 = vmul.f32 %v623, 100.0
        %v649 = vmul.f32 %v624, 100.0
        %v650 = vmul.f32 %v625, 100.0
        %v651 = vmul.f32 %v626, 100.0
        %v652 = vmul.f32 %v627, 100.0
        %v653 = vmul.f32 %v628, 100.0
        %vm654 = vcmp.gt.f32.partialorder %v647, 20.0
        %vm655 = vcmp.gt.f32.partialorder %v648, 20.0
        %vm656 = vcmp.gt.f32.partialorder %v649, 20.0
        %vm657 = vcmp.gt.f32.partialorder %v650, 20.0
        %vm658 = vcmp.gt.f32.partialorder %v651, 20.0
        %vm659 = vcmp.gt.f32.partialorder %v652, 20.0
        %vm660 = vcmp.gt.f32.partialorder %v653, 20.0
        %v661 = vmin.f32 %v647, 20.0
        %v662 = vmin.f32 %v648, 20.0
        %v663 = vmin.f32 %v649, 20.0
        %v664 = vmin.f32 %v650, 20.0
        %v665 = vmin.f32 %v651, 20.0
        %v666 = vmin.f32 %v652, 20.0
        %v667 = vmin.f32 %v653, 20.0
        %v668 = vmul.f32 %v661, 1.442695
        %v669 = vpow.pop %v668
        %v670 = vmul.f32 %v662, 1.442695
        %v671 = vpow.pop %v670
        %v672 = vmul.f32 %v663, 1.442695
        %v673 = vpow.pop %v672
        %v674 = vmul.f32 %v664, 1.442695
        %v675 = vpow.pop %v674
        %v676 = vmul.f32 %v665, 1.442695
        %v677 = vpow.pop %v676
        %v678 = vmul.f32 %v666, 1.442695
        %v679 = vpow.pop %v678
        %v680 = vmul.f32 %v667, 1.442695
        %v681 = vpow.pop %v680
        %v682 = vadd.f32 %v669, 1.0
        %v683 = vlog2.pop %v682
        %v684 = vmul.f32 %v683, 0.6931472
        %v685 = vmul.f32 -0.5, %v669
        %v686 = vadd.f32 %v685, 1.0
        %v687 = vmul.f32 %v686, %v669
        %v688 = vand.u32 2147483647, %v669
        %vm689 = vcmp.lt.f32.partialorder %v688, 0.0004427343
        %v690 = vsel %vm689, %v687, %v684
        %v691 = vadd.f32 %v671, 1.0
        %v692 = vlog2.pop %v691
        %v693 = vmul.f32 %v692, 0.6931472
        %v694 = vmul.f32 -0.5, %v671
        %v695 = vadd.f32 %v694, 1.0
        %v696 = vmul.f32 %v695, %v671
        %v697 = vand.u32 2147483647, %v671
        %vm698 = vcmp.lt.f32.partialorder %v697, 0.0004427343
        %v699 = vsel %vm698, %v696, %v693
        %v700 = vadd.f32 %v673, 1.0
        %v701 = vlog2.pop %v700
        %v702 = vmul.f32 %v701, 0.6931472
        %v703 = vmul.f32 -0.5, %v673
        %v704 = vadd.f32 %v703, 1.0
        %v705 = vmul.f32 %v704, %v673
        %v706 = vand.u32 2147483647, %v673
        %vm707 = vcmp.lt.f32.partialorder %v706, 0.0004427343
        %v708 = vsel %vm707, %v705, %v702
        %v709 = vadd.f32 %v675, 1.0
        %v710 = vlog2.pop %v709
        %v711 = vmul.f32 %v710, 0.6931472
        %v712 = vmul.f32 -0.5, %v675
        %v713 = vadd.f32 %v712, 1.0
        %v714 = vmul.f32 %v713, %v675
        %v715 = vand.u32 2147483647, %v675
        %vm716 = vcmp.lt.f32.partialorder %v715, 0.0004427343
        %v717 = vsel %vm716, %v714, %v711
        %v718 = vadd.f32 %v677, 1.0
        %v719 = vlog2.pop %v718
        %v720 = vmul.f32 %v719, 0.6931472
        %v721 = vmul.f32 -0.5, %v677
        %v722 = vadd.f32 %v721, 1.0
        %v723 = vmul.f32 %v722, %v677
        %v724 = vand.u32 2147483647, %v677
        %vm725 = vcmp.lt.f32.partialorder %v724, 0.0004427343
        %v726 = vsel %vm725, %v723, %v720
        %v727 = vadd.f32 %v679, 1.0
        %v728 = vlog2.pop %v727
        %v729 = vmul.f32 %v728, 0.6931472
        %v730 = vmul.f32 -0.5, %v679
        %v731 = vadd.f32 %v730, 1.0
        %v732 = vmul.f32 %v731, %v679
        %v733 = vand.u32 2147483647, %v679
        %vm734 = vcmp.lt.f32.partialorder %v733, 0.0004427343
        %v735 = vsel %vm734, %v732, %v729
        %v736 = vadd.f32 %v681, 1.0
        %v737 = vlog2.pop %v736
        %v738 = vmul.f32 %v737, 0.6931472
        %v739 = vmul.f32 -0.5, %v681
        %v740 = vadd.f32 %v739, 1.0
        %v741 = vmul.f32 %v740, %v681
        %v742 = vand.u32 2147483647, %v681
        %vm743 = vcmp.lt.f32.partialorder %v742, 0.0004427343
        %v744 = vsel %vm743, %v741, %v738
        %v745 = vmul.f32 %v690, 0.01
        %v746 = vmul.f32 %v699, 0.01
        %v747 = vmul.f32 %v708, 0.01
        %v748 = vmul.f32 %v717, 0.01
        %v749 = vmul.f32 %v726, 0.01
        %v750 = vmul.f32 %v735, 0.01
        %v751 = vmul.f32 %v744, 0.01
        %v752 = vsel %vm654, %v622, %v745
        %v753 = vsel %vm655, %v623, %v746
        %v754 = vsel %vm656, %v624, %v747
        %v755 = vsel %vm657, %v625, %v748
        %v756 = vsel %vm658, %v626, %v749
        %v757 = vsel %vm659, %v627, %v750
        %v758 = vsel %vm660, %v628, %v751
        %v759 = vld [vmem:[#allocation2] sm:$0xf]
        %v760 = vld [vmem:[#allocation2 + $0x10] sm:$0xf]
        %v761 = vld [vmem:[#allocation2 + $0x20] sm:$0xf]
        %v762 = vld [vmem:[#allocation2 + $0x30] sm:$0xf]
        %v763 = vld [vmem:[#allocation2 + $0x40] sm:$0xf]
        %v764 = vld [vmem:[#allocation2 + $0x50] sm:$0xf]
        %v765 = vld [vmem:[#allocation2 + $0x60] sm:$0xf]
        %v766 = vld [vmem:[#allocation2 + $0x70] sm:$0xf]
        %v767 = vld [vmem:[#allocation2 + $0x80] sm:$0xf]
        %v768 = vld [vmem:[#allocation2 + $0x90] sm:$0xf]
        %v769 = vld [vmem:[#allocation2 + $0xa0] sm:$0xf]
        %v770 = vld [vmem:[#allocation2 + $0xb0] sm:$0xf]
        %v771 = vld [vmem:[#allocation2 + $0xc0] sm:$0xf]
        %v772 = vld [vmem:[#allocation2 + $0xd0] sm:$0xf]
        %v773 = vld [vmem:[#allocation2 + $0xe0] sm:$0xf]
        %v774 = vld [vmem:[#allocation2 + $0xf0] sm:$0xf]
        %v775 = vld [vmem:[%s3 + $0x1] sm:$0x1]
        %v776 = vpack.c.bf16 %v753, %v752
        %v777 = vpack.c.bf16 %v755, %v754
        %v778 = vpack.c.bf16 %v757, %v756
        %v779 = vpack.c.bf16 %v758, %v758
        %v781 = vlaneseq
        %v782 = vshrl.u32 %v781, 7
        %v783 = vsub.s32 0, %v782
        %v784 = vrot.slane %v775, %v783
        %v802 = vunpack.c.l.b16 %v759
        %v803 = vunpack.c.l.b16 %v760
        %v804 = vunpack.c.l.b16 %v761
        %v805 = vunpack.c.l.b16 %v762
        %v806 = vunpack.c.l.b16 %v763
        %v807 = vunpack.c.l.b16 %v764
        %v808 = vunpack.c.l.b16 %v765
        %v809 = vunpack.c.l.b16 %v766
        %v810 = vunpack.c.l.b16 %v767
        %v811 = vunpack.c.l.b16 %v768
        %v812 = vunpack.c.l.b16 %v769
        %v813 = vunpack.c.l.b16 %v770
        %v814 = vunpack.c.l.b16 %v771
        %v815 = vunpack.c.l.b16 %v772
        %v816 = vunpack.c.l.b16 %v773
        %v817 = vunpack.c.l.b16 %v774
        %v818 = vpack.c.b16 %v803, %v802
        %v819 = vpack.c.b16 %v805, %v804
        %v820 = vpack.c.b16 %v807, %v806
        %v821 = vpack.c.b16 %v809, %v808
        %v822 = vpack.c.b16 %v811, %v810
        %v823 = vpack.c.b16 %v813, %v812
        %v824 = vpack.c.b16 %v815, %v814
        %v825 = vpack.c.b16 %v817, %v816
        %834 = vmatprep.subr.bf16.mxu0 0
        %835 = vmatpush1.bf16.msra.mxu0 %v818
        %836 = vmatprep.subr.bf16.mxu0 0
        %837 = vmatpush1.bf16.msra.mxu0 %v819
        %838 = vmatprep.subr.bf16.mxu0 0
        %839 = vmatpush1.bf16.msra.mxu0 %v820
        %840 = vmatprep.subr.bf16.mxu0 0
        %841 = vmatpush1.bf16.msra.mxu0 %v821
        %842 = vmatprep.subr.bf16.mxu0 0
        %843 = vmatpush1.bf16.msra.mxu0 %v822
        %844 = vmatprep.subr.bf16.mxu0 0
        %845 = vmatpush1.bf16.msra.mxu0 %v823
        %846 = vmatprep.subr.bf16.mxu0 0
        %847 = vmatpush1.bf16.msra.mxu0 %v824
        %848 = vmatprep.subr.bf16.mxu0 0
        %849 = vmatpush1.bf16.msra.mxu0 %v825
        %850 = vmatprep.subr.bf16.mxu0 0
        %851 = vmatpush1.bf16.msra.mxu0 0
        %852 = vmatprep.subr.bf16.mxu0 0
        %853 = vmatpush1.bf16.msra.mxu0 0
        %854 = vmatprep.subr.bf16.mxu0 0
        %855 = vmatpush1.bf16.msra.mxu0 0
        %856 = vmatprep.subr.bf16.mxu0 0
        %857 = vmatpush1.bf16.msra.mxu0 0
        %858 = vmatprep.subr.bf16.mxu0 0
        %859 = vmatpush1.bf16.msra.mxu0 0
        %860 = vmatprep.subr.bf16.mxu0 0
        %861 = vmatpush1.bf16.msra.mxu0 0
        %862 = vmatprep.subr.bf16.mxu0 0
        %863 = vmatpush1.bf16.msra.mxu0 0
        %864 = vmatprep.subr.bf16.mxu0 0
        %865 = vmatpush1.bf16.msra.mxu0 0
        %866 = vmatprep.mubr.bf16.mxu0 0
        %867 = vmatmul.mubr.bf16.gmra.mrb[0].mxu0 %v776
        %v868 = vpop.f32.mrb[0].mxu0
        %v869 = vadd.f32 %v784, %v868
        %v870 = vpop.f32.mrb[0].mxu0
        %v871 = vpop.f32.mrb[0].mxu0
        %v872 = vadd.f32 %v784, %v871
        %v873 = vpop.f32.mrb[0].mxu0
        %874 = vmatprep.mubr.bf16.mxu0 0
        %875 = vmatmul.mubr.bf16.gmra.mrb[0].mxu0 %v777
        %v876 = vpop.f32.mrb[0].mxu0
        %v877 = vadd.f32 %v784, %v876
        %v878 = vpop.f32.mrb[0].mxu0
        %v879 = vpop.f32.mrb[0].mxu0
        %v880 = vadd.f32 %v784, %v879
        %v881 = vpop.f32.mrb[0].mxu0
        %882 = vmatprep.mubr.bf16.mxu0 0
        %883 = vmatmul.mubr.bf16.gmra.mrb[0].mxu0 %v778
        %v884 = vpop.f32.mrb[0].mxu0
        %v885 = vadd.f32 %v784, %v884
        %v886 = vpop.f32.mrb[0].mxu0
        %v887 = vpop.f32.mrb[0].mxu0
        %v888 = vadd.f32 %v784, %v887
        %v889 = vpop.f32.mrb[0].mxu0
        %890 = vmatprep.mubr.bf16.mxu0 0
        %891 = vmatmul.mubr.bf16.gmra.mrb[0].mxu0 %v779
        %v892 = vpop.f32.mrb[0].mxu0
        %v893 = vadd.f32 %v784, %v892
        %v894 = vpop.f32.mrb[0].mxu0
        %v895 = vpop.f32.mrb[0].mxu0
        %v896 = vpop.f32.mrb[0].mxu0
        %897 = vdwg.mxu0
        %v898 = vmul.f32 %v869, 100.0
        %v899 = vmul.f32 %v872, 100.0
        %v900 = vmul.f32 %v877, 100.0
        %v901 = vmul.f32 %v880, 100.0
        %v902 = vmul.f32 %v885, 100.0
        %v903 = vmul.f32 %v888, 100.0
        %v904 = vmul.f32 %v893, 100.0
        %vm905 = vcmp.gt.f32.partialorder %v898, 20.0
        %vm906 = vcmp.gt.f32.partialorder %v899, 20.0
        %vm907 = vcmp.gt.f32.partialorder %v900, 20.0
        %vm908 = vcmp.gt.f32.partialorder %v901, 20.0
        %vm909 = vcmp.gt.f32.partialorder %v902, 20.0
        %vm910 = vcmp.gt.f32.partialorder %v903, 20.0
        %vm911 = vcmp.gt.f32.partialorder %v904, 20.0
        %v912 = vmin.f32 %v898, 20.0
        %v913 = vmin.f32 %v899, 20.0
        %v914 = vmin.f32 %v900, 20.0
        %v915 = vmin.f32 %v901, 20.0
        %v916 = vmin.f32 %v902, 20.0
        %v917 = vmin.f32 %v903, 20.0
        %v918 = vmin.f32 %v904, 20.0
        %v919 = vmul.f32 %v912, 1.442695
        %v920 = vpow.pop %v919
        %v921 = vmul.f32 %v913, 1.442695
        %v922 = vpow.pop %v921
        %v923 = vmul.f32 %v914, 1.442695
        %v924 = vpow.pop %v923
        %v925 = vmul.f32 %v915, 1.442695
        %v926 = vpow.pop %v925
        %v927 = vmul.f32 %v916, 1.442695
        %v928 = vpow.pop %v927
        %v929 = vmul.f32 %v917, 1.442695
        %v930 = vpow.pop %v929
        %v931 = vmul.f32 %v918, 1.442695
        %v932 = vpow.pop %v931
        %v933 = vadd.f32 %v920, 1.0
        %v934 = vlog2.pop %v933
        %v935 = vmul.f32 %v934, 0.6931472
        %v936 = vmul.f32 -0.5, %v920
        %v937 = vadd.f32 %v936, 1.0
        %v938 = vmul.f32 %v937, %v920
        %v939 = vand.u32 2147483647, %v920
        %vm940 = vcmp.lt.f32.partialorder %v939, 0.0004427343
        %v941 = vsel %vm940, %v938, %v935
        %v942 = vadd.f32 %v922, 1.0
        %v943 = vlog2.pop %v942
        %v944 = vmul.f32 %v943, 0.6931472
        %v945 = vmul.f32 -0.5, %v922
        %v946 = vadd.f32 %v945, 1.0
        %v947 = vmul.f32 %v946, %v922
        %v948 = vand.u32 2147483647, %v922
        %vm949 = vcmp.lt.f32.partialorder %v948, 0.0004427343
        %v950 = vsel %vm949, %v947, %v944
        %v951 = vadd.f32 %v924, 1.0
        %v952 = vlog2.pop %v951
        %v953 = vmul.f32 %v952, 0.6931472
        %v954 = vmul.f32 -0.5, %v924
        %v955 = vadd.f32 %v954, 1.0
        %v956 = vmul.f32 %v955, %v924
        %v957 = vand.u32 2147483647, %v924
        %vm958 = vcmp.lt.f32.partialorder %v957, 0.0004427343
        %v959 = vsel %vm958, %v956, %v953
        %v960 = vadd.f32 %v926, 1.0
        %v961 = vlog2.pop %v960
        %v962 = vmul.f32 %v961, 0.6931472
        %v963 = vmul.f32 -0.5, %v926
        %v964 = vadd.f32 %v963, 1.0
        %v965 = vmul.f32 %v964, %v926
        %v966 = vand.u32 2147483647, %v926
        %vm967 = vcmp.lt.f32.partialorder %v966, 0.0004427343
        %v968 = vsel %vm967, %v965, %v962
        %v969 = vadd.f32 %v928, 1.0
        %v970 = vlog2.pop %v969
        %v971 = vmul.f32 %v970, 0.6931472
        %v972 = vmul.f32 -0.5, %v928
        %v973 = vadd.f32 %v972, 1.0
        %v974 = vmul.f32 %v973, %v928
        %v975 = vand.u32 2147483647, %v928
        %vm976 = vcmp.lt.f32.partialorder %v975, 0.0004427343
        %v977 = vsel %vm976, %v974, %v971
        %v978 = vadd.f32 %v930, 1.0
        %v979 = vlog2.pop %v978
        %v980 = vmul.f32 %v979, 0.6931472
        %v981 = vmul.f32 -0.5, %v930
        %v982 = vadd.f32 %v981, 1.0
        %v983 = vmul.f32 %v982, %v930
        %v984 = vand.u32 2147483647, %v930
        %vm985 = vcmp.lt.f32.partialorder %v984, 0.0004427343
        %v986 = vsel %vm985, %v983, %v980
        %v987 = vadd.f32 %v932, 1.0
        %v988 = vlog2.pop %v987
        %v989 = vmul.f32 %v988, 0.6931472
        %v990 = vmul.f32 -0.5, %v932
        %v991 = vadd.f32 %v990, 1.0
        %v992 = vmul.f32 %v991, %v932
        %v993 = vand.u32 2147483647, %v932
        %vm994 = vcmp.lt.f32.partialorder %v993, 0.0004427343
        %v995 = vsel %vm994, %v992, %v989
        %v996 = vmul.f32 %v941, 0.01
        %v997 = vmul.f32 %v950, 0.01
        %v998 = vmul.f32 %v959, 0.01
        %v999 = vmul.f32 %v968, 0.01
        %v1000 = vmul.f32 %v977, 0.01
        %v1001 = vmul.f32 %v986, 0.01
        %v1002 = vmul.f32 %v995, 0.01
        %v1003 = vsel %vm905, %v869, %v996
        %v1004 = vsel %vm906, %v872, %v997
        %v1005 = vsel %vm907, %v877, %v998
        %v1006 = vsel %vm908, %v880, %v999
        %v1007 = vsel %vm909, %v885, %v1000
        %v1008 = vsel %vm910, %v888, %v1001
        %v1009 = vsel %vm911, %v893, %v1002
        %v1010 = vld [vmem:[#allocation2 + $0x4] sm:$0xf]
        %v1011 = vld [vmem:[#allocation2 + $0x14] sm:$0xf]
        %v1012 = vld [vmem:[#allocation2 + $0x24] sm:$0xf]
        %v1013 = vld [vmem:[#allocation2 + $0x34] sm:$0xf]
        %v1014 = vld [vmem:[#allocation2 + $0x44] sm:$0xf]
        %v1015 = vld [vmem:[#allocation2 + $0x54] sm:$0xf]
        %v1016 = vld [vmem:[#allocation2 + $0x64] sm:$0xf]
        %v1017 = vld [vmem:[#allocation2 + $0x74] sm:$0xf]
        %v1018 = vld [vmem:[#allocation2 + $0x84] sm:$0xf]
        %v1019 = vld [vmem:[#allocation2 + $0x94] sm:$0xf]
        %v1020 = vld [vmem:[#allocation2 + $0xa4] sm:$0xf]
        %v1021 = vld [vmem:[#allocation2 + $0xb4] sm:$0xf]
        %v1022 = vld [vmem:[#allocation2 + $0xc4] sm:$0xf]
        %v1023 = vld [vmem:[#allocation2 + $0xd4] sm:$0xf]
        %v1024 = vld [vmem:[#allocation2 + $0xe4] sm:$0xf]
        %v1025 = vld [vmem:[#allocation2 + $0xf4] sm:$0xf]
        %v1026 = vpack.c.bf16 %v1004, %v1003
        %v1027 = vpack.c.bf16 %v1006, %v1005
        %v1028 = vpack.c.bf16 %v1008, %v1007
        %v1029 = vpack.c.bf16 %v1009, %v1009
        %v1046 = vunpack.c.l.b16 %v1010
        %v1047 = vunpack.c.l.b16 %v1011
        %v1048 = vunpack.c.l.b16 %v1012
        %v1049 = vunpack.c.l.b16 %v1013
        %v1050 = vunpack.c.l.b16 %v1014
        %v1051 = vunpack.c.l.b16 %v1015
        %v1052 = vunpack.c.l.b16 %v1016
        %v1053 = vunpack.c.l.b16 %v1017
        %v1054 = vunpack.c.l.b16 %v1018
        %v1055 = vunpack.c.l.b16 %v1019
        %v1056 = vunpack.c.l.b16 %v1020
        %v1057 = vunpack.c.l.b16 %v1021
        %v1058 = vunpack.c.l.b16 %v1022
        %v1059 = vunpack.c.l.b16 %v1023
        %v1060 = vunpack.c.l.b16 %v1024
        %v1061 = vunpack.c.l.b16 %v1025
        %v1062 = vpack.c.b16 %v1047, %v1046
        %v1063 = vpack.c.b16 %v1049, %v1048
        %v1064 = vpack.c.b16 %v1051, %v1050
        %v1065 = vpack.c.b16 %v1053, %v1052
        %v1066 = vpack.c.b16 %v1055, %v1054
        %v1067 = vpack.c.b16 %v1057, %v1056
        %v1068 = vpack.c.b16 %v1059, %v1058
        %v1069 = vpack.c.b16 %v1061, %v1060
        %1078 = vmatprep.subr.bf16.mxu0 0
        %1079 = vmatpush1.bf16.msra.mxu0 %v1062
        %1080 = vmatprep.subr.bf16.mxu0 0
        %1081 = vmatpush1.bf16.msra.mxu0 %v1063
        %1082 = vmatprep.subr.bf16.mxu0 0
        %1083 = vmatpush1.bf16.msra.mxu0 %v1064
        %1084 = vmatprep.subr.bf16.mxu0 0
        %1085 = vmatpush1.bf16.msra.mxu0 %v1065
        %1086 = vmatprep.subr.bf16.mxu0 0
        %1087 = vmatpush1.bf16.msra.mxu0 %v1066
        %1088 = vmatprep.subr.bf16.mxu0 0
        %1089 = vmatpush1.bf16.msra.mxu0 %v1067
        %1090 = vmatprep.subr.bf16.mxu0 0
        %1091 = vmatpush1.bf16.msra.mxu0 %v1068
        %1092 = vmatprep.subr.bf16.mxu0 0
        %1093 = vmatpush1.bf16.msra.mxu0 %v1069
        %1094 = vmatprep.subr.bf16.mxu0 0
        %1095 = vmatpush1.bf16.msra.mxu0 0
        %1096 = vmatprep.subr.bf16.mxu0 0
        %1097 = vmatpush1.bf16.msra.mxu0 0
        %1098 = vmatprep.subr.bf16.mxu0 0
        %1099 = vmatpush1.bf16.msra.mxu0 0
        %1100 = vmatprep.subr.bf16.mxu0 0
        %1101 = vmatpush1.bf16.msra.mxu0 0
        %1102 = vmatprep.subr.bf16.mxu0 0
        %1103 = vmatpush1.bf16.msra.mxu0 0
        %1104 = vmatprep.subr.bf16.mxu0 0
        %1105 = vmatpush1.bf16.msra.mxu0 0
        %1106 = vmatprep.subr.bf16.mxu0 0
        %1107 = vmatpush1.bf16.msra.mxu0 0
        %1108 = vmatprep.subr.bf16.mxu0 0
        %1109 = vmatpush1.bf16.msra.mxu0 0
        %1110 = vmatprep.mubr.bf16.mxu0 0
        %1111 = vmatmul.mubr.bf16.gmra.mrb[0].mxu0 %v1026
        %v1112 = vpop.f32.mrb[0].mxu0
        %v1113 = vadd.f32 %v640, %v1112
        %v1114 = vpop.f32.mrb[0].mxu0
        %v1115 = vpop.f32.mrb[0].mxu0
        %v1116 = vadd.f32 %v641, %v1115
        %v1117 = vpop.f32.mrb[0].mxu0
        %1118 = vmatprep.mubr.bf16.mxu0 0
        %1119 = vmatmul.mubr.bf16.gmra.mrb[0].mxu0 %v1027
        %v1120 = vpop.f32.mrb[0].mxu0
        %v1121 = vadd.f32 %v642, %v1120
        %v1122 = vpop.f32.mrb[0].mxu0
        %v1123 = vpop.f32.mrb[0].mxu0
        %v1124 = vadd.f32 %v643, %v1123
        %v1125 = vpop.f32.mrb[0].mxu0
        %1126 = vmatprep.mubr.bf16.mxu0 0
        %1127 = vmatmul.mubr.bf16.gmra.mrb[0].mxu0 %v1028
        %v1128 = vpop.f32.mrb[0].mxu0
        %v1129 = vadd.f32 %v644, %v1128
        %v1130 = vpop.f32.mrb[0].mxu0
        %v1131 = vpop.f32.mrb[0].mxu0
        %v1132 = vadd.f32 %v645, %v1131
        %v1133 = vpop.f32.mrb[0].mxu0
        %1134 = vmatprep.mubr.bf16.mxu0 0
        %1135 = vmatmul.mubr.bf16.gmra.mrb[0].mxu0 %v1029
        %v1136 = vpop.f32.mrb[0].mxu0
        %v1137 = vadd.f32 %v646, %v1136
        %v1138 = vpop.f32.mrb[0].mxu0
        %v1139 = vpop.f32.mrb[0].mxu0
        %v1140 = vpop.f32.mrb[0].mxu0
        %1141 = vdwg.mxu0
        %v1142 = vmul.f32 %v1113, 100.0
        %v1143 = vmul.f32 %v1116, 100.0
        %v1144 = vmul.f32 %v1121, 100.0
        %v1145 = vmul.f32 %v1124, 100.0
        %v1146 = vmul.f32 %v1129, 100.0
        %v1147 = vmul.f32 %v1132, 100.0
        %v1148 = vmul.f32 %v1137, 100.0
        %vm1149 = vcmp.gt.f32.partialorder %v1142, 20.0
        %vm1150 = vcmp.gt.f32.partialorder %v1143, 20.0
        %vm1151 = vcmp.gt.f32.partialorder %v1144, 20.0
        %vm1152 = vcmp.gt.f32.partialorder %v1145, 20.0
        %vm1153 = vcmp.gt.f32.partialorder %v1146, 20.0
        %vm1154 = vcmp.gt.f32.partialorder %v1147, 20.0
        %vm1155 = vcmp.gt.f32.partialorder %v1148, 20.0
        %v1156 = vmin.f32 %v1142, 20.0
        %v1157 = vmin.f32 %v1143, 20.0
        %v1158 = vmin.f32 %v1144, 20.0
        %v1159 = vmin.f32 %v1145, 20.0
        %v1160 = vmin.f32 %v1146, 20.0
        %v1161 = vmin.f32 %v1147, 20.0
        %v1162 = vmin.f32 %v1148, 20.0
        %v1163 = vmul.f32 %v1156, 1.442695
        %v1164 = vpow.pop %v1163
        %v1165 = vmul.f32 %v1157, 1.442695
        %v1166 = vpow.pop %v1165
        %v1167 = vmul.f32 %v1158, 1.442695
        %v1168 = vpow.pop %v1167
        %v1169 = vmul.f32 %v1159, 1.442695
        %v1170 = vpow.pop %v1169
        %v1171 = vmul.f32 %v1160, 1.442695
        %v1172 = vpow.pop %v1171
        %v1173 = vmul.f32 %v1161, 1.442695
        %v1174 = vpow.pop %v1173
        %v1175 = vmul.f32 %v1162, 1.442695
        %v1176 = vpow.pop %v1175
        %v1177 = vadd.f32 %v1164, 1.0
        %v1178 = vlog2.pop %v1177
        %v1179 = vmul.f32 %v1178, 0.6931472
        %v1180 = vmul.f32 -0.5, %v1164
        %v1181 = vadd.f32 %v1180, 1.0
        %v1182 = vmul.f32 %v1181, %v1164
        %v1183 = vand.u32 2147483647, %v1164
        %vm1184 = vcmp.lt.f32.partialorder %v1183, 0.0004427343
        %v1185 = vsel %vm1184, %v1182, %v1179
        %v1186 = vadd.f32 %v1166, 1.0
        %v1187 = vlog2.pop %v1186
        %v1188 = vmul.f32 %v1187, 0.6931472
        %v1189 = vmul.f32 -0.5, %v1166
        %v1190 = vadd.f32 %v1189, 1.0
        %v1191 = vmul.f32 %v1190, %v1166
        %v1192 = vand.u32 2147483647, %v1166
        %vm1193 = vcmp.lt.f32.partialorder %v1192, 0.0004427343
        %v1194 = vsel %vm1193, %v1191, %v1188
        %v1195 = vadd.f32 %v1168, 1.0
        %v1196 = vlog2.pop %v1195
        %v1197 = vmul.f32 %v1196, 0.6931472
        %v1198 = vmul.f32 -0.5, %v1168
        %v1199 = vadd.f32 %v1198, 1.0
        %v1200 = vmul.f32 %v1199, %v1168
        %v1201 = vand.u32 2147483647, %v1168
        %vm1202 = vcmp.lt.f32.partialorder %v1201, 0.0004427343
        %v1203 = vsel %vm1202, %v1200, %v1197
        %v1204 = vadd.f32 %v1170, 1.0
        %v1205 = vlog2.pop %v1204
        %v1206 = vmul.f32 %v1205, 0.6931472
        %v1207 = vmul.f32 -0.5, %v1170
        %v1208 = vadd.f32 %v1207, 1.0
        %v1209 = vmul.f32 %v1208, %v1170
        %v1210 = vand.u32 2147483647, %v1170
        %vm1211 = vcmp.lt.f32.partialorder %v1210, 0.0004427343
        %v1212 = vsel %vm1211, %v1209, %v1206
        %v1213 = vadd.f32 %v1172, 1.0
        %v1214 = vlog2.pop %v1213
        %v1215 = vmul.f32 %v1214, 0.6931472
        %v1216 = vmul.f32 -0.5, %v1172
        %v1217 = vadd.f32 %v1216, 1.0
        %v1218 = vmul.f32 %v1217, %v1172
        %v1219 = vand.u32 2147483647, %v1172
        %vm1220 = vcmp.lt.f32.partialorder %v1219, 0.0004427343
        %v1221 = vsel %vm1220, %v1218, %v1215
        %v1222 = vadd.f32 %v1174, 1.0
        %v1223 = vlog2.pop %v1222
        %v1224 = vmul.f32 %v1223, 0.6931472
        %v1225 = vmul.f32 -0.5, %v1174
        %v1226 = vadd.f32 %v1225, 1.0
        %v1227 = vmul.f32 %v1226, %v1174
        %v1228 = vand.u32 2147483647, %v1174
        %vm1229 = vcmp.lt.f32.partialorder %v1228, 0.0004427343
        %v1230 = vsel %vm1229, %v1227, %v1224
        %v1231 = vadd.f32 %v1176, 1.0
        %v1232 = vlog2.pop %v1231
        %v1233 = vmul.f32 %v1232, 0.6931472
        %v1234 = vmul.f32 -0.5, %v1176
        %v1235 = vadd.f32 %v1234, 1.0
        %v1236 = vmul.f32 %v1235, %v1176
        %v1237 = vand.u32 2147483647, %v1176
        %vm1238 = vcmp.lt.f32.partialorder %v1237, 0.0004427343
        %v1239 = vsel %vm1238, %v1236, %v1233
        %v1240 = vmul.f32 %v1185, 0.01
        %v1241 = vmul.f32 %v1194, 0.01
        %v1242 = vmul.f32 %v1203, 0.01
        %v1243 = vmul.f32 %v1212, 0.01
        %v1244 = vmul.f32 %v1221, 0.01
        %v1245 = vmul.f32 %v1230, 0.01
        %v1246 = vmul.f32 %v1239, 0.01
        %v1247 = vsel %vm1149, %v1113, %v1240
        %v1248 = vsel %vm1150, %v1116, %v1241
        %v1249 = vsel %vm1151, %v1121, %v1242
        %v1250 = vsel %vm1152, %v1124, %v1243
        %v1251 = vsel %vm1153, %v1129, %v1244
        %v1252 = vsel %vm1154, %v1132, %v1245
        %v1253 = vsel %vm1155, %v1137, %v1246
        %v1254 = vld [vmem:[#allocation2 + $0x8] sm:$0xf]
        %v1255 = vld [vmem:[#allocation2 + $0x18] sm:$0xf]
        %v1256 = vld [vmem:[#allocation2 + $0x28] sm:$0xf]
        %v1257 = vld [vmem:[#allocation2 + $0x38] sm:$0xf]
        %v1258 = vld [vmem:[#allocation2 + $0x48] sm:$0xf]
        %v1259 = vld [vmem:[#allocation2 + $0x58] sm:$0xf]
        %v1260 = vld [vmem:[#allocation2 + $0x68] sm:$0xf]
        %v1261 = vld [vmem:[#allocation2 + $0x78] sm:$0xf]
        %v1262 = vld [vmem:[#allocation2 + $0x88] sm:$0xf]
        %v1263 = vld [vmem:[#allocation2 + $0x98] sm:$0xf]
        %v1264 = vld [vmem:[#allocation2 + $0xa8] sm:$0xf]
        %v1265 = vld [vmem:[#allocation2 + $0xb8] sm:$0xf]
        %v1266 = vld [vmem:[#allocation2 + $0xc8] sm:$0xf]
        %v1267 = vld [vmem:[#allocation2 + $0xd8] sm:$0xf]
        %v1268 = vld [vmem:[#allocation2 + $0xe8] sm:$0xf]
        %v1269 = vld [vmem:[#allocation2 + $0xf8] sm:$0xf]
        %v1270 = vld [vmem:[%s3 + $0x3] sm:$0x1]
        %v1271 = vpack.c.bf16 %v1248, %v1247
        %v1272 = vpack.c.bf16 %v1250, %v1249
        %v1273 = vpack.c.bf16 %v1252, %v1251
        %v1274 = vpack.c.bf16 %v1253, %v1253
        %v1276 = vlaneseq
        %v1277 = vshrl.u32 %v1276, 7
        %v1278 = vsub.s32 0, %v1277
        %v1279 = vrot.slane %v1270, %v1278
        %v1297 = vunpack.c.l.b16 %v1254
        %v1298 = vunpack.c.l.b16 %v1255
        %v1299 = vunpack.c.l.b16 %v1256
        %v1300 = vunpack.c.l.b16 %v1257
        %v1301 = vunpack.c.l.b16 %v1258
        %v1302 = vunpack.c.l.b16 %v1259
        %v1303 = vunpack.c.l.b16 %v1260
        %v1304 = vunpack.c.l.b16 %v1261
        %v1305 = vunpack.c.l.b16 %v1262
        %v1306 = vunpack.c.l.b16 %v1263
        %v1307 = vunpack.c.l.b16 %v1264
        %v1308 = vunpack.c.l.b16 %v1265
        %v1309 = vunpack.c.l.b16 %v1266
        %v1310 = vunpack.c.l.b16 %v1267
        %v1311 = vunpack.c.l.b16 %v1268
        %v1312 = vunpack.c.l.b16 %v1269
        %v1313 = vpack.c.b16 %v1298, %v1297
        %v1314 = vpack.c.b16 %v1300, %v1299
        %v1315 = vpack.c.b16 %v1302, %v1301
        %v1316 = vpack.c.b16 %v1304, %v1303
        %v1317 = vpack.c.b16 %v1306, %v1305
        %v1318 = vpack.c.b16 %v1308, %v1307
        %v1319 = vpack.c.b16 %v1310, %v1309
        %v1320 = vpack.c.b16 %v1312, %v1311
        %1329 = vmatprep.subr.bf16.mxu0 0
        %1330 = vmatpush1.bf16.msra.mxu0 %v1313
        %1331 = vmatprep.subr.bf16.mxu0 0
        %1332 = vmatpush1.bf16.msra.mxu0 %v1314
        %1333 = vmatprep.subr.bf16.mxu0 0
        %1334 = vmatpush1.bf16.msra.mxu0 %v1315
        %1335 = vmatprep.subr.bf16.mxu0 0
        %1336 = vmatpush1.bf16.msra.mxu0 %v1316
        %1337 = vmatprep.subr.bf16.mxu0 0
        %1338 = vmatpush1.bf16.msra.mxu0 %v1317
        %1339 = vmatprep.subr.bf16.mxu0 0
        %1340 = vmatpush1.bf16.msra.mxu0 %v1318
        %1341 = vmatprep.subr.bf16.mxu0 0
        %1342 = vmatpush1.bf16.msra.mxu0 %v1319
        %1343 = vmatprep.subr.bf16.mxu0 0
        %1344 = vmatpush1.bf16.msra.mxu0 %v1320
        %1345 = vmatprep.subr.bf16.mxu0 0
        %1346 = vmatpush1.bf16.msra.mxu0 0
        %1347 = vmatprep.subr.bf16.mxu0 0
        %1348 = vmatpush1.bf16.msra.mxu0 0
        %1349 = vmatprep.subr.bf16.mxu0 0
        %1350 = vmatpush1.bf16.msra.mxu0 0
        %1351 = vmatprep.subr.bf16.mxu0 0
        %1352 = vmatpush1.bf16.msra.mxu0 0
        %1353 = vmatprep.subr.bf16.mxu0 0
        %1354 = vmatpush1.bf16.msra.mxu0 0
        %1355 = vmatprep.subr.bf16.mxu0 0
        %1356 = vmatpush1.bf16.msra.mxu0 0
        %1357 = vmatprep.subr.bf16.mxu0 0
        %1358 = vmatpush1.bf16.msra.mxu0 0
        %1359 = vmatprep.subr.bf16.mxu0 0
        %1360 = vmatpush1.bf16.msra.mxu0 0
        %1361 = vmatprep.mubr.bf16.mxu0 0
        %1362 = vmatmul.mubr.bf16.gmra.mrb[0].mxu0 %v1271
        %v1363 = vpop.f32.mrb[0].mxu0
        %v1364 = vadd.f32 %v1279, %v1363
        %v1365 = vpop.f32.mrb[0].mxu0
        %v1366 = vpop.f32.mrb[0].mxu0
        %v1367 = vadd.f32 %v1279, %v1366
        %v1368 = vpop.f32.mrb[0].mxu0
        %1369 = vmatprep.mubr.bf16.mxu0 0
        %1370 = vmatmul.mubr.bf16.gmra.mrb[0].mxu0 %v1272
        %v1371 = vpop.f32.mrb[0].mxu0
        %v1372 = vadd.f32 %v1279, %v1371
        %v1373 = vpop.f32.mrb[0].mxu0
        %v1374 = vpop.f32.mrb[0].mxu0
        %v1375 = vadd.f32 %v1279, %v1374
        %v1376 = vpop.f32.mrb[0].mxu0
        %1377 = vmatprep.mubr.bf16.mxu0 0
        %1378 = vmatmul.mubr.bf16.gmra.mrb[0].mxu0 %v1273
        %v1379 = vpop.f32.mrb[0].mxu0
        %v1380 = vadd.f32 %v1279, %v1379
        %v1381 = vpop.f32.mrb[0].mxu0
        %v1382 = vpop.f32.mrb[0].mxu0
        %v1383 = vadd.f32 %v1279, %v1382
        %v1384 = vpop.f32.mrb[0].mxu0
        %1385 = vmatprep.mubr.bf16.mxu0 0
        %1386 = vmatmul.mubr.bf16.gmra.mrb[0].mxu0 %v1274
        %v1387 = vpop.f32.mrb[0].mxu0
        %v1388 = vadd.f32 %v1279, %v1387
        %v1389 = vpop.f32.mrb[0].mxu0
        %v1390 = vpop.f32.mrb[0].mxu0
        %v1391 = vpop.f32.mrb[0].mxu0
        %1392 = vdwg.mxu0
        %v1393 = vmul.f32 %v1364, 100.0
        %v1394 = vmul.f32 %v1367, 100.0
        %v1395 = vmul.f32 %v1372, 100.0
        %v1396 = vmul.f32 %v1375, 100.0
        %v1397 = vmul.f32 %v1380, 100.0
        %v1398 = vmul.f32 %v1383, 100.0
        %v1399 = vmul.f32 %v1388, 100.0
        %vm1400 = vcmp.gt.f32.partialorder %v1393, 20.0
        %vm1401 = vcmp.gt.f32.partialorder %v1394, 20.0
        %vm1402 = vcmp.gt.f32.partialorder %v1395, 20.0
        %vm1403 = vcmp.gt.f32.partialorder %v1396, 20.0
        %vm1404 = vcmp.gt.f32.partialorder %v1397, 20.0
        %vm1405 = vcmp.gt.f32.partialorder %v1398, 20.0
        %vm1406 = vcmp.gt.f32.partialorder %v1399, 20.0
        %v1407 = vmin.f32 %v1393, 20.0
        %v1408 = vmin.f32 %v1394, 20.0
        %v1409 = vmin.f32 %v1395, 20.0
        %v1410 = vmin.f32 %v1396, 20.0
        %v1411 = vmin.f32 %v1397, 20.0
        %v1412 = vmin.f32 %v1398, 20.0
        %v1413 = vmin.f32 %v1399, 20.0
        %v1414 = vmul.f32 %v1407, 1.442695
        %v1415 = vpow.pop %v1414
        %v1416 = vmul.f32 %v1408, 1.442695
        %v1417 = vpow.pop %v1416
        %v1418 = vmul.f32 %v1409, 1.442695
        %v1419 = vpow.pop %v1418
        %v1420 = vmul.f32 %v1410, 1.442695
        %v1421 = vpow.pop %v1420
        %v1422 = vmul.f32 %v1411, 1.442695
        %v1423 = vpow.pop %v1422
        %v1424 = vmul.f32 %v1412, 1.442695
        %v1425 = vpow.pop %v1424
        %v1426 = vmul.f32 %v1413, 1.442695
        %v1427 = vpow.pop %v1426
        %v1428 = vadd.f32 %v1415, 1.0
        %v1429 = vlog2.pop %v1428
        %v1430 = vmul.f32 %v1429, 0.6931472
        %v1431 = vmul.f32 -0.5, %v1415
        %v1432 = vadd.f32 %v1431, 1.0
        %v1433 = vmul.f32 %v1432, %v1415
        %v1434 = vand.u32 2147483647, %v1415
        %vm1435 = vcmp.lt.f32.partialorder %v1434, 0.0004427343
        %v1436 = vsel %vm1435, %v1433, %v1430
        %v1437 = vadd.f32 %v1417, 1.0
        %v1438 = vlog2.pop %v1437
        %v1439 = vmul.f32 %v1438, 0.6931472
        %v1440 = vmul.f32 -0.5, %v1417
        %v1441 = vadd.f32 %v1440, 1.0
        %v1442 = vmul.f32 %v1441, %v1417
        %v1443 = vand.u32 2147483647, %v1417
        %vm1444 = vcmp.lt.f32.partialorder %v1443, 0.0004427343
        %v1445 = vsel %vm1444, %v1442, %v1439
        %v1446 = vadd.f32 %v1419, 1.0
        %v1447 = vlog2.pop %v1446
        %v1448 = vmul.f32 %v1447, 0.6931472
        %v1449 = vmul.f32 -0.5, %v1419
        %v1450 = vadd.f32 %v1449, 1.0
        %v1451 = vmul.f32 %v1450, %v1419
        %v1452 = vand.u32 2147483647, %v1419
        %vm1453 = vcmp.lt.f32.partialorder %v1452, 0.0004427343
        %v1454 = vsel %vm1453, %v1451, %v1448
        %v1455 = vadd.f32 %v1421, 1.0
        %v1456 = vlog2.pop %v1455
        %v1457 = vmul.f32 %v1456, 0.6931472
        %v1458 = vmul.f32 -0.5, %v1421
        %v1459 = vadd.f32 %v1458, 1.0
        %v1460 = vmul.f32 %v1459, %v1421
        %v1461 = vand.u32 2147483647, %v1421
        %vm1462 = vcmp.lt.f32.partialorder %v1461, 0.0004427343
        %v1463 = vsel %vm1462, %v1460, %v1457
        %v1464 = vadd.f32 %v1423, 1.0
        %v1465 = vlog2.pop %v1464
        %v1466 = vmul.f32 %v1465, 0.6931472
        %v1467 = vmul.f32 -0.5, %v1423
        %v1468 = vadd.f32 %v1467, 1.0
        %v1469 = vmul.f32 %v1468, %v1423
        %v1470 = vand.u32 2147483647, %v1423
        %vm1471 = vcmp.lt.f32.partialorder %v1470, 0.0004427343
        %v1472 = vsel %vm1471, %v1469, %v1466
        %v1473 = vadd.f32 %v1425, 1.0
        %v1474 = vlog2.pop %v1473
        %v1475 = vmul.f32 %v1474, 0.6931472
        %v1476 = vmul.f32 -0.5, %v1425
        %v1477 = vadd.f32 %v1476, 1.0
        %v1478 = vmul.f32 %v1477, %v1425
        %v1479 = vand.u32 2147483647, %v1425
        %vm1480 = vcmp.lt.f32.partialorder %v1479, 0.0004427343
        %v1481 = vsel %vm1480, %v1478, %v1475
        %v1482 = vadd.f32 %v1427, 1.0
        %v1483 = vlog2.pop %v1482
        %v1484 = vmul.f32 %v1483, 0.6931472
        %v1485 = vmul.f32 -0.5, %v1427
        %v1486 = vadd.f32 %v1485, 1.0
        %v1487 = vmul.f32 %v1486, %v1427
        %v1488 = vand.u32 2147483647, %v1427
        %vm1489 = vcmp.lt.f32.partialorder %v1488, 0.0004427343
        %v1490 = vsel %vm1489, %v1487, %v1484
        %v1491 = vmul.f32 %v1436, 0.01
        %v1492 = vmul.f32 %v1445, 0.01
        %v1493 = vmul.f32 %v1454, 0.01
        %v1494 = vmul.f32 %v1463, 0.01
        %v1495 = vmul.f32 %v1472, 0.01
        %v1496 = vmul.f32 %v1481, 0.01
        %v1497 = vmul.f32 %v1490, 0.01
        %v1498 = vsel %vm1400, %v1364, %v1491
        %v1499 = vsel %vm1401, %v1367, %v1492
        %v1500 = vsel %vm1402, %v1372, %v1493
        %v1501 = vsel %vm1403, %v1375, %v1494
        %v1502 = vsel %vm1404, %v1380, %v1495
        %v1503 = vsel %vm1405, %v1383, %v1496
        %v1504 = vsel %vm1406, %v1388, %v1497
        %v1505 = vld [vmem:[#allocation2 + $0xc] sm:$0xf]
        %v1506 = vld [vmem:[#allocation2 + $0x1c] sm:$0xf]
        %v1507 = vld [vmem:[#allocation2 + $0x2c] sm:$0xf]
        %v1508 = vld [vmem:[#allocation2 + $0x3c] sm:$0xf]
        %v1509 = vld [vmem:[#allocation2 + $0x4c] sm:$0xf]
        %v1510 = vld [vmem:[#allocation2 + $0x5c] sm:$0xf]
        %v1511 = vld [vmem:[#allocation2 + $0x6c] sm:$0xf]
        %v1512 = vld [vmem:[#allocation2 + $0x7c] sm:$0xf]
        %v1513 = vld [vmem:[#allocation2 + $0x8c] sm:$0xf]
        %v1514 = vld [vmem:[#allocation2 + $0x9c] sm:$0xf]
        %v1515 = vld [vmem:[#allocation2 + $0xac] sm:$0xf]
        %v1516 = vld [vmem:[#allocation2 + $0xbc] sm:$0xf]
        %v1517 = vld [vmem:[#allocation2 + $0xcc] sm:$0xf]
        %v1518 = vld [vmem:[#allocation2 + $0xdc] sm:$0xf]
        %v1519 = vld [vmem:[#allocation2 + $0xec] sm:$0xf]
        %v1520 = vld [vmem:[#allocation2 + $0xfc] sm:$0xf]
        %v1521 = vld [vmem:[%s3 + $0x4] sm:$0x1]
        %v1522 = vpack.c.bf16 %v1499, %v1498
        %v1523 = vpack.c.bf16 %v1501, %v1500
        %v1524 = vpack.c.bf16 %v1503, %v1502
        %v1525 = vpack.c.bf16 %v1504, %v1504
        %v1527 = vlaneseq
        %v1528 = vshrl.u32 %v1527, 7
        %v1529 = vsub.s32 0, %v1528
        %v1530 = vrot.slane %v1521, %v1529
        %v1548 = vunpack.c.l.b16 %v1505
        %v1549 = vunpack.c.l.b16 %v1506
        %v1550 = vunpack.c.l.b16 %v1507
        %v1551 = vunpack.c.l.b16 %v1508
        %v1552 = vunpack.c.l.b16 %v1509
        %v1553 = vunpack.c.l.b16 %v1510
        %v1554 = vunpack.c.l.b16 %v1511
        %v1555 = vunpack.c.l.b16 %v1512
        %v1556 = vunpack.c.l.b16 %v1513
        %v1557 = vunpack.c.l.b16 %v1514
        %v1558 = vunpack.c.l.b16 %v1515
        %v1559 = vunpack.c.l.b16 %v1516
        %v1560 = vunpack.c.l.b16 %v1517
        %v1561 = vunpack.c.l.b16 %v1518
        %v1562 = vunpack.c.l.b16 %v1519
        %v1563 = vunpack.c.l.b16 %v1520
        %v1564 = vpack.c.b16 %v1549, %v1548
        %v1565 = vpack.c.b16 %v1551, %v1550
        %v1566 = vpack.c.b16 %v1553, %v1552
        %v1567 = vpack.c.b16 %v1555, %v1554
        %v1568 = vpack.c.b16 %v1557, %v1556
        %v1569 = vpack.c.b16 %v1559, %v1558
        %v1570 = vpack.c.b16 %v1561, %v1560
        %v1571 = vpack.c.b16 %v1563, %v1562
        %1580 = vmatprep.subr.bf16.mxu0 0
        %1581 = vmatpush1.bf16.msra.mxu0 %v1564
        %1582 = vmatprep.subr.bf16.mxu0 0
        %1583 = vmatpush1.bf16.msra.mxu0 %v1565
        %1584 = vmatprep.subr.bf16.mxu0 0
        %1585 = vmatpush1.bf16.msra.mxu0 %v1566
        %1586 = vmatprep.subr.bf16.mxu0 0
        %1587 = vmatpush1.bf16.msra.mxu0 %v1567
        %1588 = vmatprep.subr.bf16.mxu0 0
        %1589 = vmatpush1.bf16.msra.mxu0 %v1568
        %1590 = vmatprep.subr.bf16.mxu0 0
        %1591 = vmatpush1.bf16.msra.mxu0 %v1569
        %1592 = vmatprep.subr.bf16.mxu0 0
        %1593 = vmatpush1.bf16.msra.mxu0 %v1570
        %1594 = vmatprep.subr.bf16.mxu0 0
        %1595 = vmatpush1.bf16.msra.mxu0 %v1571
        %1596 = vmatprep.subr.bf16.mxu0 0
        %1597 = vmatpush1.bf16.msra.mxu0 0
        %1598 = vmatprep.subr.bf16.mxu0 0
        %1599 = vmatpush1.bf16.msra.mxu0 0
        %1600 = vmatprep.subr.bf16.mxu0 0
        %1601 = vmatpush1.bf16.msra.mxu0 0
        %1602 = vmatprep.subr.bf16.mxu0 0
        %1603 = vmatpush1.bf16.msra.mxu0 0
        %1604 = vmatprep.subr.bf16.mxu0 0
        %1605 = vmatpush1.bf16.msra.mxu0 0
        %1606 = vmatprep.subr.bf16.mxu0 0
        %1607 = vmatpush1.bf16.msra.mxu0 0
        %1608 = vmatprep.subr.bf16.mxu0 0
        %1609 = vmatpush1.bf16.msra.mxu0 0
        %1610 = vmatprep.subr.bf16.mxu0 0
        %1611 = vmatpush1.bf16.msra.mxu0 0
        %1612 = vmatprep.mubr.bf16.mxu0 0
        %1613 = vmatmul.mubr.bf16.gmra.mrb[0].mxu0 %v1522
        %v1614 = vpop.f32.mrb[0].mxu0
        %v1615 = vadd.f32 %v1530, %v1614
        %v1616 = vpop.f32.mrb[0].mxu0
        %v1617 = vpop.f32.mrb[0].mxu0
        %v1618 = vadd.f32 %v1530, %v1617
        %v1619 = vpop.f32.mrb[0].mxu0
        %1620 = vmatprep.mubr.bf16.mxu0 0
        %1621 = vmatmul.mubr.bf16.gmra.mrb[0].mxu0 %v1523
        %v1622 = vpop.f32.mrb[0].mxu0
        %v1623 = vadd.f32 %v1530, %v1622
        %v1624 = vpop.f32.mrb[0].mxu0
        %v1625 = vpop.f32.mrb[0].mxu0
        %v1626 = vadd.f32 %v1530, %v1625
        %v1627 = vpop.f32.mrb[0].mxu0
        %1628 = vmatprep.mubr.bf16.mxu0 0
        %1629 = vmatmul.mubr.bf16.gmra.mrb[0].mxu0 %v1524
        %v1630 = vpop.f32.mrb[0].mxu0
        %v1631 = vadd.f32 %v1530, %v1630
        %v1632 = vpop.f32.mrb[0].mxu0
        %v1633 = vpop.f32.mrb[0].mxu0
        %v1634 = vadd.f32 %v1530, %v1633
        %v1635 = vpop.f32.mrb[0].mxu0
        %1636 = vmatprep.mubr.bf16.mxu0 0
        %1637 = vmatmul.mubr.bf16.gmra.mrb[0].mxu0 %v1525
        %v1638 = vpop.f32.mrb[0].mxu0
        %v1639 = vadd.f32 %v1530, %v1638
        %v1640 = vpop.f32.mrb[0].mxu0
        %v1641 = vpop.f32.mrb[0].mxu0
        %v1642 = vpop.f32.mrb[0].mxu0
        %1643 = vdwg.mxu0
        %1644 = vst [vmem:[%s208] sm:$0xff] %v1615
        %1645 = vst [vmem:[%s208 + $0x8] sm:$0xff] %v1618
        %1646 = vst [vmem:[%s208 + $0x10] sm:$0xff] %v1623
        %1647 = vst [vmem:[%s208 + $0x18] sm:$0xff] %v1626
        %1648 = vst [vmem:[%s208 + $0x20] sm:$0xff] %v1631
        %1649 = vst [vmem:[%s208 + $0x28] sm:$0xff] %v1634
        %1650 = vst [vmem:[%s208 + $0x30] sm:$0xff] %v1639
        %s1651 = sand.u32 %s116, 1
        %s1652 = scalar_lea.sflag [#allocation4], %s1651
        %s1653 = sand.u32 %s116, 1
        %s1654 = smul.addr %s1653, 56
        %s1655 = scalar_lea.vmem [#allocation5], %s1654
        // Predicated region
        $region41: #{tpu_custom_call.1} parent=35 // pred_check
          %p1656 = pneg %p126
        $region42: #{tpu_custom_call.1} parent=35 // pred_check_branch
          %1658 = sbr.rel (%p1656) target = $region44
        $region43: #{tpu_custom_call.1} parent=35 // pred_region
          %s1659 = smul.u32 7, %s19
          %s1661 = ssub.s32 896, 896
          %1662 = vsyncadd %s1652, %s1661
          %s1663 = smul.addr %s1659, 128
          %s1664 = scalar_lea.hbm %s4, %s1663
          %s1665 = sshll.u32 %s1655, 4
          %s1666 = int_to_ptr.vmem [resolvable:$true] %s1665
          %1671 = dma.vmem_to_hbm [thread:$0]  %s1666, 896, %s1664, %s1652, 128, 128, 8
        $region44: #{tpu_custom_call.1} parent=35 // pred_fallthru
          _
      $region36: #{tpu_custom_call.1} parent=5 // pred_fallthru
        _
      %p1672 = scmp.le.s32.totalorder 2, %s14
      // Predicated region
      $region45: #{tpu_custom_call.1} parent=5 // pred_check
        %p1673 = pneg %p1672
      $region46: #{tpu_custom_call.1} parent=5 // pred_check_branch
        %1675 = sbr.rel (%p1673) target = $region48
      $region47: #{tpu_custom_call.1} parent=5 // pred_region
        %s1676 = ssub.s32 %s14, 2
        // Predicated region
        $region49: #{tpu_custom_call.1} parent=47 // pred_check
          %p1677 = pneg %p132
        $region50: #{tpu_custom_call.1} parent=47 // pred_check_branch
          %1679 = sbr.rel (%p1677) target = $region52
        $region51: #{tpu_custom_call.1} parent=47 // pred_region
          %s1680 = sand.u32 %s117, 1
          %s1681 = scalar_lea.sflag [#allocation4], %s1680
          %s1682 = sand.u32 %s117, 1
          %s1683 = smul.addr %s1682, 56
          %s1684 = scalar_lea.vmem [#allocation5], %s1683
          %1685 = dma.done %s1681, 896
        $region52: #{tpu_custom_call.1} parent=47 // pred_fallthru
          _
      $region48: #{tpu_custom_call.1} parent=5 // pred_fallthru
        _
    $region6: #{tpu_custom_call.1} parent=1 // loop_footer
      %s18 = sadd.s32 1, %s14
    $region7: #{tpu_custom_call.1} parent=1 // loop_footer_branch
      %13 = sbr.rel target = $region3
    $region8: #{tpu_custom_call.1} parent=1 // loop_exit
      _
    %1686 = vsyncpa [#allocation3], 1
    %s1687 = scalar_lea.sflag [#allocation3], 1
    %1688 = vsyncpa %s1687, 1
    %1689 = vsyncpa [#allocation4], 1
    %s1690 = scalar_lea.sflag [#allocation4], 1
    %1691 = vsyncpa %s1690, 1

</llo_original>
